<compile_context>
chip_gen: v7x
topology: tpu7x:2x2x1
jax: 0.10.0
libtpu: 0.0.40
codegen_flags: <defaults>
</compile_context>

<pallas_src>
import functools

import jax
import jax.numpy as jnp
import numpy as np
from jax.experimental import pallas as pl
from jax.experimental.pallas import tpu as pltpu

ACT_ALPHA = 0.2   # leaky-relu negative slope used by GeneralConv (act_alpha)
KS = 3            # conv kernel size (k_size default), 'same' pad = 1


# ----------------------------- fused Pallas kernel ---------------------------
def _make_dblock_kernel(H, W, Cin, Hid, Cout, alpha, with_from_rgb):
    """from_rgb (opt) -> conv3x3(+fused residual 1x1) -> conv3x3 -> add."""
    PW = W + 2  # padded width (in pixels)

    def leaky(v):
        return jnp.where(v >= 0.0, v, v * alpha)

    def stage_padded(pad_ref, interior, C):
        # Zero ONLY the 1-px halo ring, then write the interior rows.
        # Every element of the scratch is (re)written each grid step, so the
        # kernel has no cross-step scratch dependence ("parallel" is safe).
        pad_ref[0:1, :] = jnp.zeros((1, PW * C), jnp.float32)
        pad_ref[H + 1:H + 2, :] = jnp.zeros((1, PW * C), jnp.float32)
        pad_ref[:, 0:C] = jnp.zeros((H + 2, C), jnp.float32)
        pad_ref[:, (W + 1) * C:PW * C] = jnp.zeros((H + 2, C), jnp.float32)
        pad_ref[1:1 + H, C:C + W * C] = interior

    def band_conv(pad_ref, w_ref, b_ref):
        # 'same' 3x3 conv in lane-folded layout: 3 row-shifted band matmuls.
        z = b_ref[...]
        for s in range(KS):  # static unroll, static slices
            z = z + jnp.dot(pad_ref[s:s + H, :], w_ref[s],
                            preferred_element_type=jnp.float32)
        return z

    def kernel(*refs):
        if with_from_rgb:
            (x_ref, wrgb_ref, brgb_ref, w1_ref, b1_ref, w2_ref, b2_ref,
             o_ref, xpad_ref, hpad_ref) = refs
        else:
            (x_ref, w1_ref, b1_ref, w2_ref, b2_ref,
             o_ref, xpad_ref, hpad_ref) = refs

        # ---- from_rgb: 1x1 conv + leaky, block-diagonal folded weight ----
        if with_from_rgb:
            x0 = leaky(jnp.dot(x_ref[...], wrgb_ref[...],
                               preferred_element_type=jnp.float32)
                       + brgb_ref[...])                    # (H, W*Cin)
        else:
            x0 = x_ref[...].astype(jnp.float32)            # already (H, W*Cin)

        # ---- conv3x3 #1 with residual 1x1 fused as extra output columns ----
        stage_padded(xpad_ref, x0, Cin)
        z1 = band_conv(xpad_ref, w1_ref, b1_ref)           # (H, W*(Hid+Cout))
        h1 = leaky(z1[:, :W * Hid])                        # 128-aligned split
        res = z1[:, W * Hid:]                              # residual: no act

        # ---- conv3x3 #2 ----
        stage_padded(hpad_ref, h1, Hid)
        h2 = leaky(band_conv(hpad_ref, w2_ref, b2_ref))    # (H, W*Cout)

        # ---- residual add, lane-dense (H, W*Cout) store ----
        o_ref[...] = (h2 + res).astype(o_ref.dtype)

    return kernel


# ------------------------ host-side (XLA) weight folding ---------------------
# All constructions below use gather + multiply-by-{0,1} mask only (no dots),
# so the folded weights are bit-exact copies of the originals.
def _band_selectors(W):
    p = np.arange(W + 2)[:, None]
    w = np.arange(W)[None, :]
    kwidx = p - w                                            # (W+2, W)
    mask = ((kwidx >= 0) & (kwidx < KS)).astype(np.float32)
    kwidx = np.clip(kwidx, 0, KS - 1)
    return jnp.asarray(kwidx), jnp.asarray(mask)


def _fold_conv3x3(wt, W):
    """(3,3,C,Co) conv weight -> (3, (W+2)*C, W*Co) row-shift band weights."""
    _, _, C, Co = wt.shape
    kwidx, mask = _band_selectors(W)
    g = wt[:, kwidx, :, :]                                   # (3, W+2, W, C, Co)
    g = g * mask[None, :, :, None, None]
    g = jnp.transpose(g, (0, 1, 3, 2, 4))                    # (3, W+2, C, W, Co)
    return g.reshape(KS, (W + 2) * C, W * Co)


def _fold_1x1_center(wres, W, Cin):
    """Residual 1x1 (Cin,Cout) as extra band columns hit only by the center tap."""
    Cout = wres.shape[-1]
    p = np.arange(W + 2)[:, None]
    w = np.arange(W)[None, :]
    cmask = jnp.asarray((p == w + 1).astype(np.float32))     # (W+2, W)
    blk = cmask[:, None, :, None] * wres[None, :, None, :]   # (W+2,Cin,W,Cout)
    blk = blk.reshape((W + 2) * Cin, W * Cout)
    out = jnp.zeros((KS, (W + 2) * Cin, W * Cout), jnp.float32)
    return out.at[1].set(blk)                                # only s == 1 (kh=1)


def _fold_1x1_diag(w, W):
    """1x1 conv (Ci,Co) as a block-diagonal (W*Ci, W*Co) folded-lane weight."""
    Ci, Co = w.shape
    eye = jnp.asarray(np.eye(W, dtype=np.float32))
    m = eye[:, None, :, None] * w[None, :, None, :]          # (W, Ci, W, Co)
    return m.reshape(W * Ci, W * Co)


def _tile_bias(b, W):
    return jnp.tile(b.reshape(1, -1).astype(jnp.float32), (1, W))


# ------------------------------ pallas wrapper --------------------------------
def _dblock_pallas(params, x_nhwc, first):
    N, H, W, Cx = x_nhwc.shape
    _, _, Cin, Hid = params["w1"].shape
    Cout = params["w2"].shape[-1]

    # Fold weights into lane-dense banded / block-diagonal form (XLA side).
    w1b = _fold_conv3x3(params["w1"].astype(jnp.float32), W)
    wres = params["w_res"].reshape(Cin, Cout).astype(jnp.float32)
    w1b = jnp.concatenate([w1b, _fold_1x1_center(wres, W, Cin)], axis=-1)
    b1b = jnp.concatenate([_tile_bias(params["b1"], W),
                           _tile_bias(params["b_res"], W)], axis=-1)
    w2b = _fold_conv3x3(params["w2"].astype(jnp.float32), W)
    b2b = _tile_bias(params["b2"], W)

    # Lane-folded input slab: (N*H, W*Cx); reshape done here, not in the kernel.
    x2d = x_nhwc.astype(jnp.float32).reshape(N * H, W * Cx)

    args = [x2d]
    in_specs = [pl.BlockSpec((H, W * Cx), lambda n: (n, 0))]
    if first:
        wrgbd = _fold_1x1_diag(
            params["w_rgb"].reshape(-1, Cin).astype(jnp.float32), W)
        brgbb = _tile_bias(params["b_rgb"], W)
        args += [wrgbd, brgbb]
        in_specs += [pl.BlockSpec(wrgbd.shape, lambda n: (0, 0)),
                     pl.BlockSpec(brgbb.shape, lambda n: (0, 0))]
    args += [w1b, b1b, w2b, b2b]
    in_specs += [pl.BlockSpec(w1b.shape, lambda n: (0, 0, 0)),
                 pl.BlockSpec(b1b.shape, lambda n: (0, 0)),
                 pl.BlockSpec(w2b.shape, lambda n: (0, 0, 0)),
                 pl.BlockSpec(b2b.shape, lambda n: (0, 0))]

    kernel = _make_dblock_kernel(H, W, Cin, Hid, Cout,
                                 float(ACT_ALPHA), bool(first))

    out2d = pl.pallas_call(
        kernel,
        out_shape=jax.ShapeDtypeStruct((N * H, W * Cout), jnp.float32),
        grid=(N,),                       # real grid over batch -> pipelining
        in_specs=in_specs,
        out_specs=pl.BlockSpec((H, W * Cout), lambda n: (n, 0)),
        scratch_shapes=[                 # per-image padded stages, lane-folded
            pltpu.VMEM((H + 2, (W + 2) * Cin), jnp.float32),
            pltpu.VMEM((H + 2, (W + 2) * Hid), jnp.float32),
        ],
        compiler_params=pltpu.CompilerParams(
            dimension_semantics=("parallel",),       # megacore batch split
            vmem_limit_bytes=32 * 1024 * 1024),
    )(*args)
    return out2d.reshape(N, H, W, Cout)


# ------------------------------ public wrapper -------------------------------
@functools.partial(jax.jit, static_argnames=("first",))
def dblock_forward(params, x_nchw, first=True):
    # NCHW <-> NHWC plumbing kept for PyTorch API parity; drop it if the
    # downstream consumer can take NHWC / lane-folded outputs directly.
    x = jnp.transpose(x_nchw, (0, 2, 3, 1))
    y = _dblock_pallas(params, x, first)
    return jnp.transpose(y, (0, 3, 1, 2))


# ------------------------------ DBlock params ---------------------------------
def init_dblock_params(key, ch_in, ch_out, ch_rgb, hidden, k):
    """Deterministic synthetic params; equalized-LR scale folded into weights."""
    ks = jax.random.split(key, 8)

    def w(kk, shape):  # He / equalized init
        fan_in = shape[0] * shape[1] * shape[2]
        return (jax.random.normal(kk, shape, jnp.float32)
                * np.sqrt(2.0 / fan_in)).astype(jnp.float32)

    def bias(kk, c):
        return (0.1 * jax.random.normal(kk, (c,), jnp.float32)).astype(jnp.float32)

    return dict(
        w_rgb=w(ks[0], (1, 1, ch_rgb, ch_in)),  b_rgb=bias(ks[1], ch_in),
        w1=w(ks[2], (k, k, ch_in, hidden)),     b1=bias(ks[3], hidden),
        w2=w(ks[4], (k, k, hidden, ch_out)),    b2=bias(ks[5], ch_out),
        w_res=w(ks[6], (1, 1, ch_in, ch_out)),  b_res=bias(ks[7], ch_out),
    )


# --------------------------- pure-JAX reference -------------------------------
def _conv_ref(x, w, b, alpha):
    y = jax.lax.conv_general_dilated(
        x, w, (1, 1), "SAME",
        dimension_numbers=("NHWC", "HWIO", "NHWC")) + b.reshape(1, 1, 1, -1)
    if alpha >= 0:
        y = jnp.where(y >= 0, y, y * alpha)
    return y


def dblock_reference(params, x_nchw, first=True):
    x = jnp.transpose(x_nchw, (0, 2, 3, 1))
    if first:
        x = _conv_ref(x, params["w_rgb"], params["b_rgb"], ACT_ALPHA)
    h = _conv_ref(x, params["w1"], params["b1"], ACT_ALPHA)
    h = _conv_ref(h, params["w2"], params["b2"], ACT_ALPHA)
    h = h + _conv_ref(x, params["w_res"], params["b_res"], -1.0)
    return jnp.transpose(h, (0, 3, 1, 2))


# --------------------------------- main ----------------------------------------
if __name__ == "__main__":
    key = jax.random.PRNGKey(0)
    k_param, k_x, k_x2 = jax.random.split(key, 3)

    N, ch_rgb, H, W = 2, 4, 16, 16
    ch_in, ch_out = 8, 16
    hidden = max(ch_in, 4)

    params = init_dblock_params(k_param, ch_in, ch_out, ch_rgb, hidden, KS)

    # first=True path (from_rgb applied)
    x = jax.random.normal(k_x, (N, ch_rgb, H, W), jnp.float32)
    out = jax.block_until_ready(dblock_forward(params, x, first=True))
    ref = dblock_reference(params, x, first=True)
    np.testing.assert_allclose(np.asarray(out), np.asarray(ref),
                               rtol=1e-4, atol=1e-4)
    assert out.shape == (N, ch_out, H, W)

    # first=False path (input already has ch_in channels)
    x2 = jax.random.normal(k_x2, (N, ch_in, H, W), jnp.float32)
    out2 = jax.block_until_ready(dblock_forward(params, x2, first=False))
    ref2 = dblock_reference(params, x2, first=False)
    np.testing.assert_allclose(np.asarray(out2), np.asarray(ref2),
                               rtol=1e-4, atol=1e-4)

    print("KERNEL_OK")
</pallas_src>

<mosaic_0001>
module attributes {stable_mosaic.version = 11 : i64} {
  func.func @kernel(%arg0: i32, %arg1: memref<16x64xf32, #tpu.memory_space<vmem>>, %arg2: memref<64x128xf32, #tpu.memory_space<vmem>>, %arg3: memref<1x128xf32, #tpu.memory_space<vmem>>, %arg4: memref<3x144x384xf32, #tpu.memory_space<vmem>>, %arg5: memref<1x384xf32, #tpu.memory_space<vmem>>, %arg6: memref<3x144x256xf32, #tpu.memory_space<vmem>>, %arg7: memref<1x256xf32, #tpu.memory_space<vmem>>, %arg8: memref<16x256xf32, #tpu.memory_space<vmem>>, %arg9: memref<18x144xf32, #tpu.memory_space<vmem>>, %arg10: memref<18x144xf32, #tpu.memory_space<vmem>>) attributes {dimension_semantics = [#tpu.dimension_semantics<parallel>], iteration_bounds = array<i64: 2>, scalar_prefetch = 0 : i64, scratch_operands = 2 : i64, tpu.core_type = #tpu.core_type<tc>, window_params = [{transform_indices = @transform_0, window_bounds = array<i64: 16, 64>}, {pipeline_mode = #tpu.pipeline_mode<synchronous>, transform_indices = @transform_1, window_bounds = array<i64: 64, 128>}, {pipeline_mode = #tpu.pipeline_mode<synchronous>, transform_indices = @transform_2, window_bounds = array<i64: 1, 128>}, {pipeline_mode = #tpu.pipeline_mode<synchronous>, transform_indices = @transform_3, window_bounds = array<i64: 3, 144, 384>}, {pipeline_mode = #tpu.pipeline_mode<synchronous>, transform_indices = @transform_4, window_bounds = array<i64: 1, 384>}, {pipeline_mode = #tpu.pipeline_mode<synchronous>, transform_indices = @transform_5, window_bounds = array<i64: 3, 144, 256>}, {pipeline_mode = #tpu.pipeline_mode<synchronous>, transform_indices = @transform_6, window_bounds = array<i64: 1, 256>}, {transform_indices = @transform_7, window_bounds = array<i64: 16, 256>}]} {
    %c0 = arith.constant 0 : index
    %c0_0 = arith.constant 0 : index
    %0 = vector.load %arg1[%c0, %c0_0] : memref<16x64xf32, #tpu.memory_space<vmem>>, vector<16x64xf32>
    %c0_1 = arith.constant 0 : index
    %c0_2 = arith.constant 0 : index
    %1 = vector.load %arg2[%c0_1, %c0_2] : memref<64x128xf32, #tpu.memory_space<vmem>>, vector<64x128xf32>
    %cst = arith.constant dense<0.000000e+00> : vector<16x128xf32>
    %2 = tpu.matmul %0, %1, %cst {dimension_numbers = #tpu.dot_dimension_numbers<[1], [0], [0], [1], [0, 0, 1, 1], [], []>} : vector<16x64xf32>, vector<64x128xf32>, vector<16x128xf32> -> vector<16x128xf32>
    %c0_3 = arith.constant 0 : index
    %c0_4 = arith.constant 0 : index
    %3 = vector.load %arg3[%c0_3, %c0_4] : memref<1x128xf32, #tpu.memory_space<vmem>>, vector<1x128xf32>
    %4 = vector.broadcast %3 : vector<1x128xf32> to vector<16x128xf32>
    %5 = arith.addf %2, %4 : vector<16x128xf32>
    %cst_5 = arith.constant 0.000000e+00 : f32
    %6 = vector.broadcast %cst_5 : f32 to vector<16x128xf32>
    %7 = arith.cmpf oge, %5, %6 : vector<16x128xf32>
    %cst_6 = arith.constant 2.000000e-01 : f32
    %8 = vector.broadcast %cst_6 : f32 to vector<16x128xf32>
    %9 = arith.mulf %5, %8 : vector<16x128xf32>
    %10 = arith.select %7, %5, %9 : vector<16x128xi1>, vector<16x128xf32>
    %cst_7 = arith.constant 0.000000e+00 : f32
    %11 = vector.broadcast %cst_7 : f32 to vector<1x144xf32>
    %c0_8 = arith.constant 0 : index
    %c0_9 = arith.constant 0 : index
    %12 = vector.load %arg9[%c0_8, %c0_9] : memref<18x144xf32, #tpu.memory_space<vmem>>, vector<1x144xf32>
    tpu.vector_store %arg9[%c0_8, %c0_9], %11 {strides = array<i32>} : memref<18x144xf32, #tpu.memory_space<vmem>>, vector<1x144xf32>,
    %cst_10 = arith.constant 0.000000e+00 : f32
    %13 = vector.broadcast %cst_10 : f32 to vector<1x144xf32>
    %c17 = arith.constant 17 : index
    %c0_11 = arith.constant 0 : index
    %14 = vector.load %arg9[%c17, %c0_11] : memref<18x144xf32, #tpu.memory_space<vmem>>, vector<1x144xf32>
    tpu.vector_store %arg9[%c17, %c0_11], %13 {strides = array<i32>} : memref<18x144xf32, #tpu.memory_space<vmem>>, vector<1x144xf32>,
    %cst_12 = arith.constant 0.000000e+00 : f32
    %15 = vector.broadcast %cst_12 : f32 to vector<18x8xf32>
    %c0_13 = arith.constant 0 : index
    %c0_14 = arith.constant 0 : index
    %16 = vector.load %arg9[%c0_13, %c0_14] : memref<18x144xf32, #tpu.memory_space<vmem>>, vector<18x8xf32>
    tpu.vector_store %arg9[%c0_13, %c0_14], %15 {strides = array<i32>} : memref<18x144xf32, #tpu.memory_space<vmem>>, vector<18x8xf32>,
    %cst_15 = arith.constant 0.000000e+00 : f32
    %17 = vector.broadcast %cst_15 : f32 to vector<18x8xf32>
    %c0_16 = arith.constant 0 : index
    %c136 = arith.constant 136 : index
    %18 = vector.load %arg9[%c0_16, %c136] : memref<18x144xf32, #tpu.memory_space<vmem>>, vector<18x8xf32>
    tpu.vector_store %arg9[%c0_16, %c136], %17 {strides = array<i32>} : memref<18x144xf32, #tpu.memory_space<vmem>>, vector<18x8xf32>,
    %c1 = arith.constant 1 : index
    %c8 = arith.constant 8 : index
    %19 = vector.load %arg9[%c1, %c8] : memref<18x144xf32, #tpu.memory_space<vmem>>, vector<16x128xf32>
    tpu.vector_store %arg9[%c1, %c8], %10 {strides = array<i32>} : memref<18x144xf32, #tpu.memory_space<vmem>>, vector<16x128xf32>,
    %c0_17 = arith.constant 0 : index
    %c0_18 = arith.constant 0 : index
    %20 = vector.load %arg5[%c0_17, %c0_18] : memref<1x384xf32, #tpu.memory_space<vmem>>, vector<1x384xf32>
    %c0_19 = arith.constant 0 : index
    %c0_20 = arith.constant 0 : index
    %21 = vector.load %arg9[%c0_19, %c0_20] : memref<18x144xf32, #tpu.memory_space<vmem>>, vector<16x144xf32>
    %c0_21 = arith.constant 0 : index
    %c0_22 = arith.constant 0 : index
    %c0_23 = arith.constant 0 : index
    %22 = vector.load %arg4[%c0_21, %c0_22, %c0_23] : memref<3x144x384xf32, #tpu.memory_space<vmem>>, vector<1x144x384xf32>
    %23 = vector.shape_cast %22 : vector<1x144x384xf32> to vector<144x384xf32>
    %cst_24 = arith.constant dense<0.000000e+00> : vector<16x384xf32>
    %24 = tpu.matmul %21, %23, %cst_24 {dimension_numbers = #tpu.dot_dimension_numbers<[1], [0], [0], [1], [0, 0, 1, 1], [], []>} : vector<16x144xf32>, vector<144x384xf32>, vector<16x384xf32> -> vector<16x384xf32>
    %25 = vector.broadcast %20 : vector<1x384xf32> to vector<16x384xf32>
    %26 = arith.addf %25, %24 : vector<16x384xf32>
    %c1_25 = arith.constant 1 : index
    %c0_26 = arith.constant 0 : index
    %27 = vector.load %arg9[%c1_25, %c0_26] : memref<18x144xf32, #tpu.memory_space<vmem>>, vector<16x144xf32>
    %c1_27 = arith.constant 1 : index
    %c0_28 = arith.constant 0 : index
    %c0_29 = arith.constant 0 : index
    %28 = vector.load %arg4[%c1_27, %c0_28, %c0_29] : memref<3x144x384xf32, #tpu.memory_space<vmem>>, vector<1x144x384xf32>
    %29 = vector.shape_cast %28 : vector<1x144x384xf32> to vector<144x384xf32>
    %cst_30 = arith.constant dense<0.000000e+00> : vector<16x384xf32>
    %30 = tpu.matmul %27, %29, %cst_30 {dimension_numbers = #tpu.dot_dimension_numbers<[1], [0], [0], [1], [0, 0, 1, 1], [], []>} : vector<16x144xf32>, vector<144x384xf32>, vector<16x384xf32> -> vector<16x384xf32>
    %31 = arith.addf %26, %30 : vector<16x384xf32>
    %c2 = arith.constant 2 : index
    %c0_31 = arith.constant 0 : index
    %32 = vector.load %arg9[%c2, %c0_31] : memref<18x144xf32, #tpu.memory_space<vmem>>, vector<16x144xf32>
    %c2_32 = arith.constant 2 : index
    %c0_33 = arith.constant 0 : index
    %c0_34 = arith.constant 0 : index
    %33 = vector.load %arg4[%c2_32, %c0_33, %c0_34] : memref<3x144x384xf32, #tpu.memory_space<vmem>>, vector<1x144x384xf32>
    %34 = vector.shape_cast %33 : vector<1x144x384xf32> to vector<144x384xf32>
    %cst_35 = arith.constant dense<0.000000e+00> : vector<16x384xf32>
    %35 = tpu.matmul %32, %34, %cst_35 {dimension_numbers = #tpu.dot_dimension_numbers<[1], [0], [0], [1], [0, 0, 1, 1], [], []>} : vector<16x144xf32>, vector<144x384xf32>, vector<16x384xf32> -> vector<16x384xf32>
    %36 = arith.addf %31, %35 : vector<16x384xf32>
    %37 = vector.extract_strided_slice %36 {offsets = [0, 0], sizes = [16, 128], strides = [1, 1]} : vector<16x384xf32> to vector<16x128xf32>
    %cst_36 = arith.constant 0.000000e+00 : f32
    %38 = vector.broadcast %cst_36 : f32 to vector<16x128xf32>
    %39 = arith.cmpf oge, %37, %38 : vector<16x128xf32>
    %cst_37 = arith.constant 2.000000e-01 : f32
    %40 = vector.broadcast %cst_37 : f32 to vector<16x128xf32>
    %41 = arith.mulf %37, %40 : vector<16x128xf32>
    %42 = arith.select %39, %37, %41 : vector<16x128xi1>, vector<16x128xf32>
    %43 = vector.extract_strided_slice %36 {offsets = [0, 128], sizes = [16, 256], strides = [1, 1]} : vector<16x384xf32> to vector<16x256xf32>
    %cst_38 = arith.constant 0.000000e+00 : f32
    %44 = vector.broadcast %cst_38 : f32 to vector<1x144xf32>
    %c0_39 = arith.constant 0 : index
    %c0_40 = arith.constant 0 : index
    %45 = vector.load %arg10[%c0_39, %c0_40] : memref<18x144xf32, #tpu.memory_space<vmem>>, vector<1x144xf32>
    tpu.vector_store %arg10[%c0_39, %c0_40], %44 {strides = array<i32>} : memref<18x144xf32, #tpu.memory_space<vmem>>, vector<1x144xf32>,
    %cst_41 = arith.constant 0.000000e+00 : f32
    %46 = vector.broadcast %cst_41 : f32 to vector<1x144xf32>
    %c17_42 = arith.constant 17 : index
    %c0_43 = arith.constant 0 : index
    %47 = vector.load %arg10[%c17_42, %c0_43] : memref<18x144xf32, #tpu.memory_space<vmem>>, vector<1x144xf32>
    tpu.vector_store %arg10[%c17_42, %c0_43], %46 {strides = array<i32>} : memref<18x144xf32, #tpu.memory_space<vmem>>, vector<1x144xf32>,
    %cst_44 = arith.constant 0.000000e+00 : f32
    %48 = vector.broadcast %cst_44 : f32 to vector<18x8xf32>
    %c0_45 = arith.constant 0 : index
    %c0_46 = arith.constant 0 : index
    %49 = vector.load %arg10[%c0_45, %c0_46] : memref<18x144xf32, #tpu.memory_space<vmem>>, vector<18x8xf32>
    tpu.vector_store %arg10[%c0_45, %c0_46], %48 {strides = array<i32>} : memref<18x144xf32, #tpu.memory_space<vmem>>, vector<18x8xf32>,
    %cst_47 = arith.constant 0.000000e+00 : f32
    %50 = vector.broadcast %cst_47 : f32 to vector<18x8xf32>
    %c0_48 = arith.constant 0 : index
    %c136_49 = arith.constant 136 : index
    %51 = vector.load %arg10[%c0_48, %c136_49] : memref<18x144xf32, #tpu.memory_space<vmem>>, vector<18x8xf32>
    tpu.vector_store %arg10[%c0_48, %c136_49], %50 {strides = array<i32>} : memref<18x144xf32, #tpu.memory_space<vmem>>, vector<18x8xf32>,
    %c1_50 = arith.constant 1 : index
    %c8_51 = arith.constant 8 : index
    %52 = vector.load %arg10[%c1_50, %c8_51] : memref<18x144xf32, #tpu.memory_space<vmem>>, vector<16x128xf32>
    tpu.vector_store %arg10[%c1_50, %c8_51], %42 {strides = array<i32>} : memref<18x144xf32, #tpu.memory_space<vmem>>, vector<16x128xf32>,
    %c0_52 = arith.constant 0 : index
    %c0_53 = arith.constant 0 : index
    %53 = vector.load %arg7[%c0_52, %c0_53] : memref<1x256xf32, #tpu.memory_space<vmem>>, vector<1x256xf32>
    %c0_54 = arith.constant 0 : index
    %c0_55 = arith.constant 0 : index
    %54 = vector.load %arg10[%c0_54, %c0_55] : memref<18x144xf32, #tpu.memory_space<vmem>>, vector<16x144xf32>
    %c0_56 = arith.constant 0 : index
    %c0_57 = arith.constant 0 : index
    %c0_58 = arith.constant 0 : index
    %55 = vector.load %arg6[%c0_56, %c0_57, %c0_58] : memref<3x144x256xf32, #tpu.memory_space<vmem>>, vector<1x144x256xf32>
    %56 = vector.shape_cast %55 : vector<1x144x256xf32> to vector<144x256xf32>
    %cst_59 = arith.constant dense<0.000000e+00> : vector<16x256xf32>
    %57 = tpu.matmul %54, %56, %cst_59 {dimension_numbers = #tpu.dot_dimension_numbers<[1], [0], [0], [1], [0, 0, 1, 1], [], []>} : vector<16x144xf32>, vector<144x256xf32>, vector<16x256xf32> -> vector<16x256xf32>
    %58 = vector.broadcast %53 : vector<1x256xf32> to vector<16x256xf32>
    %59 = arith.addf %58, %57 : vector<16x256xf32>
    %c1_60 = arith.constant 1 : index
    %c0_61 = arith.constant 0 : index
    %60 = vector.load %arg10[%c1_60, %c0_61] : memref<18x144xf32, #tpu.memory_space<vmem>>, vector<16x144xf32>
    %c1_62 = arith.constant 1 : index
    %c0_63 = arith.constant 0 : index
    %c0_64 = arith.constant 0 : index
    %61 = vector.load %arg6[%c1_62, %c0_63, %c0_64] : memref<3x144x256xf32, #tpu.memory_space<vmem>>, vector<1x144x256xf32>
    %62 = vector.shape_cast %61 : vector<1x144x256xf32> to vector<144x256xf32>
    %cst_65 = arith.constant dense<0.000000e+00> : vector<16x256xf32>
    %63 = tpu.matmul %60, %62, %cst_65 {dimension_numbers = #tpu.dot_dimension_numbers<[1], [0], [0], [1], [0, 0, 1, 1], [], []>} : vector<16x144xf32>, vector<144x256xf32>, vector<16x256xf32> -> vector<16x256xf32>
    %64 = arith.addf %59, %63 : vector<16x256xf32>
    %c2_66 = arith.constant 2 : index
    %c0_67 = arith.constant 0 : index
    %65 = vector.load %arg10[%c2_66, %c0_67] : memref<18x144xf32, #tpu.memory_space<vmem>>, vector<16x144xf32>
    %c2_68 = arith.constant 2 : index
    %c0_69 = arith.constant 0 : index
    %c0_70 = arith.constant 0 : index
    %66 = vector.load %arg6[%c2_68, %c0_69, %c0_70] : memref<3x144x256xf32, #tpu.memory_space<vmem>>, vector<1x144x256xf32>
    %67 = vector.shape_cast %66 : vector<1x144x256xf32> to vector<144x256xf32>
    %cst_71 = arith.constant dense<0.000000e+00> : vector<16x256xf32>
    %68 = tpu.matmul %65, %67, %cst_71 {dimension_numbers = #tpu.dot_dimension_numbers<[1], [0], [0], [1], [0, 0, 1, 1], [], []>} : vector<16x144xf32>, vector<144x256xf32>, vector<16x256xf32> -> vector<16x256xf32>
    %69 = arith.addf %64, %68 : vector<16x256xf32>
    %cst_72 = arith.constant 0.000000e+00 : f32
    %70 = vector.broadcast %cst_72 : f32 to vector<16x256xf32>
    %71 = arith.cmpf oge, %69, %70 : vector<16x256xf32>
    %cst_73 = arith.constant 2.000000e-01 : f32
    %72 = vector.broadcast %cst_73 : f32 to vector<16x256xf32>
    %73 = arith.mulf %69, %72 : vector<16x256xf32>
    %74 = arith.select %71, %69, %73 : vector<16x256xi1>, vector<16x256xf32>
    %75 = arith.addf %74, %43 : vector<16x256xf32>
    %c0_74 = arith.constant 0 : index
    %c0_75 = arith.constant 0 : index
    %76 = vector.load %arg8[%c0_74, %c0_75] : memref<16x256xf32, #tpu.memory_space<vmem>>, vector<16x256xf32>
    tpu.vector_store %arg8[%c0_74, %c0_75], %75 {strides = array<i32>} : memref<16x256xf32, #tpu.memory_space<vmem>>, vector<16x256xf32>,
    return
  }
  func.func @transform_0(%arg0: i32) -> (i32, i32) {
    %c0_i32 = arith.constant 0 : i32
    %c0_i32_0 = arith.constant 0 : i32
    return %arg0, %c0_i32 : i32, i32
  }
  func.func @transform_1(%arg0: i32) -> (i32, i32) {
    %c0_i32 = arith.constant 0 : i32
    %c0_i32_0 = arith.constant 0 : i32
    %c0_i32_1 = arith.constant 0 : i32
    return %c0_i32, %c0_i32_0 : i32, i32
  }
  func.func @transform_2(%arg0: i32) -> (i32, i32) {
    %c0_i32 = arith.constant 0 : i32
    %c0_i32_0 = arith.constant 0 : i32
    %c0_i32_1 = arith.constant 0 : i32
    return %c0_i32, %c0_i32_0 : i32, i32
  }
  func.func @transform_3(%arg0: i32) -> (i32, i32, i32) {
    %c0_i32 = arith.constant 0 : i32
    %c0_i32_0 = arith.constant 0 : i32
    %c0_i32_1 = arith.constant 0 : i32
    %c0_i32_2 = arith.constant 0 : i32
    return %c0_i32, %c0_i32_0, %c0_i32_1 : i32, i32, i32
  }
  func.func @transform_4(%arg0: i32) -> (i32, i32) {
    %c0_i32 = arith.constant 0 : i32
    %c0_i32_0 = arith.constant 0 : i32
    %c0_i32_1 = arith.constant 0 : i32
    return %c0_i32, %c0_i32_0 : i32, i32
  }
  func.func @transform_5(%arg0: i32) -> (i32, i32, i32) {
    %c0_i32 = arith.constant 0 : i32
    %c0_i32_0 = arith.constant 0 : i32
    %c0_i32_1 = arith.constant 0 : i32
    %c0_i32_2 = arith.constant 0 : i32
    return %c0_i32, %c0_i32_0, %c0_i32_1 : i32, i32, i32
  }
  func.func @transform_6(%arg0: i32) -> (i32, i32) {
    %c0_i32 = arith.constant 0 : i32
    %c0_i32_0 = arith.constant 0 : i32
    %c0_i32_1 = arith.constant 0 : i32
    return %c0_i32, %c0_i32_0 : i32, i32
  }
  func.func @transform_7(%arg0: i32) -> (i32, i32) {
    %c0_i32 = arith.constant 0 : i32
    %c0_i32_0 = arith.constant 0 : i32
    return %arg0, %c0_i32 : i32, i32
  }
}

</mosaic_0001>

<llo_original>
// kernel: dblock_forward.1
$region0: #{dblock_forward.1}
  #allocation0 [shape = 'u32[]', space=smem, size = 0x4, offset = 0x4, fixed_abs, tag = 'smem constant byte address 0x4 - core index']
  #allocation1 [shape = 'u32[144,128]{1,0:T(1,128)}', space=vmem, size = 0x12000, scoped, tag = 'internal scratch']
  #allocation2 [shape = 'f32[18,144]{1,0:T(8,128)}', space=vmem, size = 0x6000, scoped, tag = 'scratch operand']
  #allocation3 [shape = 'f32[18,144]{1,0:T(8,128)}', space=vmem, size = 0x6000, scoped, tag = 'scratch operand']
  %s0 = inlined_call_operand.vmem [shape: f32[32,64], index: 0, kind: input, shape index: {}]
  %s1 = inlined_call_operand.vmem [shape: f32[64,128], index: 1, kind: input, shape index: {}]
  %s2 = inlined_call_operand.vmem [shape: f32[1,128], index: 2, kind: input, shape index: {}]
  %s3 = inlined_call_operand.vmem [shape: f32[3,144,384], index: 3, kind: input, shape index: {}]
  %s4 = inlined_call_operand.vmem [shape: f32[1,384], index: 4, kind: input, shape index: {}]
  %s5 = inlined_call_operand.vmem [shape: f32[3,144,256], index: 5, kind: input, shape index: {}]
  %s6 = inlined_call_operand.vmem [shape: f32[1,256], index: 6, kind: input, shape index: {}]
  %s7 = inlined_call_operand.vmem [shape: f32[32,256], index: 7, kind: output, shape index: {}]
  %s8 = sld [smem:[#allocation0]]
  $region61: #{dblock_forward.1} parent=0
    _
  %s10 = ssub.s32 1, %s8
  %s11 = scalar_select 0, %s10, %s8
  loop: start=0, step=1, limit=4
  $region2: #{dblock_forward.1} parent=0 // loop_pre_header
    _
  $region3: #{dblock_forward.1} parent=0 // loop_header
    %s13 = sphi 0, %s17
    %p14 = scmp.ge.s32.totalorder %s13, 4
    %s23 = sphi 0, %s25
    %s26 = sphi 0, %s23
    %s27 = sphi 0, %s26
    %s43 = sphi 0, %s27
    %s47 = sphi 0, %s47
    %s49 = sphi 0, %s47
    %s50 = sphi 0, %s49
    %s64 = sphi 0, %s50
    %s68 = sphi 0, %s68
    %s70 = sphi 0, %s68
    %s71 = sphi 0, %s70
    %s85 = sphi 0, %s71
    %s89 = sphi 0, %s89
    %s91 = sphi 0, %s89
    %s92 = sphi 0, %s91
    %s106 = sphi 0, %s92
    %s110 = sphi 0, %s110
    %s112 = sphi 0, %s110
    %s113 = sphi 0, %s112
    %s127 = sphi 0, %s113
    %s131 = sphi 0, %s131
    %s133 = sphi 0, %s131
    %s134 = sphi 0, %s133
    %s148 = sphi 0, %s134
    %s152 = sphi 0, %s152
    %s154 = sphi 0, %s152
    %s155 = sphi 0, %s154
    %s169 = sphi 0, %s155
    %s175 = sphi 0, %s177
    %s178 = sphi 0, %s175
    %s179 = sphi 0, %s178
    %s195 = sphi 0, %s179
  $region4: #{dblock_forward.1} parent=0 // loop_header_branch
    %16 = sbr.rel (%p14) target = $region8
  $region5: #{dblock_forward.1} parent=0 // loop_body
    %s18 = ssub.s32 %s13, 1
    %s19 = ssub.s32 %s13, 2
    %s20 = sadd.s32 %s13, 1
    %s21 = ssub.s32 %s13, %s20
    %p22 = scmp.eq.s32.totalorder %s21, 0
    %s24 = sadd.s32 %s23, 1
    %s25 = scalar_select %p22, %s23, %s24
    %p28 = pneg %p22
    %p29 = scmp.eq.s32.totalorder %s13, 1
    %p30 = por %p28, %p29
    %p31 = scmp.ne.s32.totalorder %s23, %s26
    %p32 = scmp.eq.s32.totalorder %s13, 0
    %p33 = por %p31, %p32
    %p34 = scmp.ne.s32.totalorder %s23, %s26
    %p35 = scmp.eq.s32.totalorder %s18, 1
    %p36 = por %p34, %p35
    %p37 = scmp.ne.s32.totalorder %s26, %s27
    %p38 = scmp.eq.s32.totalorder %s18, 0
    %p39 = por %p37, %p38
    %p40 = scmp.ne.s32.totalorder %s26, %s27
    %p41 = scmp.eq.s32.totalorder %s19, 1
    %p42 = por %p40, %p41
    %p44 = scmp.ne.s32.totalorder %s27, %s43
    %p45 = scmp.eq.s32.totalorder %s19, 0
    %p46 = por %p44, %p45
    %s48 = sadd.s32 %s47, 1
    %p51 = scmp.eq.s32.totalorder %s13, 1
    %p52 = scmp.ne.s32.totalorder %s47, %s49
    %p53 = scmp.eq.s32.totalorder %s13, 0
    %p54 = por %p52, %p53
    %p55 = scmp.ne.s32.totalorder %s47, %s49
    %p56 = scmp.eq.s32.totalorder %s18, 1
    %p57 = por %p55, %p56
    %p58 = scmp.ne.s32.totalorder %s49, %s50
    %p59 = scmp.eq.s32.totalorder %s18, 0
    %p60 = por %p58, %p59
    %p61 = scmp.ne.s32.totalorder %s49, %s50
    %p62 = scmp.eq.s32.totalorder %s19, 1
    %p63 = por %p61, %p62
    %p65 = scmp.ne.s32.totalorder %s50, %s64
    %p66 = scmp.eq.s32.totalorder %s19, 0
    %p67 = por %p65, %p66
    %s69 = sadd.s32 %s68, 1
    %p72 = scmp.eq.s32.totalorder %s13, 1
    %p73 = scmp.ne.s32.totalorder %s68, %s70
    %p74 = scmp.eq.s32.totalorder %s13, 0
    %p75 = por %p73, %p74
    %p76 = scmp.ne.s32.totalorder %s68, %s70
    %p77 = scmp.eq.s32.totalorder %s18, 1
    %p78 = por %p76, %p77
    %p79 = scmp.ne.s32.totalorder %s70, %s71
    %p80 = scmp.eq.s32.totalorder %s18, 0
    %p81 = por %p79, %p80
    %p82 = scmp.ne.s32.totalorder %s70, %s71
    %p83 = scmp.eq.s32.totalorder %s19, 1
    %p84 = por %p82, %p83
    %p86 = scmp.ne.s32.totalorder %s71, %s85
    %p87 = scmp.eq.s32.totalorder %s19, 0
    %p88 = por %p86, %p87
    %s90 = sadd.s32 %s89, 1
    %p93 = scmp.eq.s32.totalorder %s13, 1
    %p94 = scmp.ne.s32.totalorder %s89, %s91
    %p95 = scmp.eq.s32.totalorder %s13, 0
    %p96 = por %p94, %p95
    %p97 = scmp.ne.s32.totalorder %s89, %s91
    %p98 = scmp.eq.s32.totalorder %s18, 1
    %p99 = por %p97, %p98
    %p100 = scmp.ne.s32.totalorder %s91, %s92
    %p101 = scmp.eq.s32.totalorder %s18, 0
    %p102 = por %p100, %p101
    %p103 = scmp.ne.s32.totalorder %s91, %s92
    %p104 = scmp.eq.s32.totalorder %s19, 1
    %p105 = por %p103, %p104
    %p107 = scmp.ne.s32.totalorder %s92, %s106
    %p108 = scmp.eq.s32.totalorder %s19, 0
    %p109 = por %p107, %p108
    %s111 = sadd.s32 %s110, 1
    %p114 = scmp.eq.s32.totalorder %s13, 1
    %p115 = scmp.ne.s32.totalorder %s110, %s112
    %p116 = scmp.eq.s32.totalorder %s13, 0
    %p117 = por %p115, %p116
    %p118 = scmp.ne.s32.totalorder %s110, %s112
    %p119 = scmp.eq.s32.totalorder %s18, 1
    %p120 = por %p118, %p119
    %p121 = scmp.ne.s32.totalorder %s112, %s113
    %p122 = scmp.eq.s32.totalorder %s18, 0
    %p123 = por %p121, %p122
    %p124 = scmp.ne.s32.totalorder %s112, %s113
    %p125 = scmp.eq.s32.totalorder %s19, 1
    %p126 = por %p124, %p125
    %p128 = scmp.ne.s32.totalorder %s113, %s127
    %p129 = scmp.eq.s32.totalorder %s19, 0
    %p130 = por %p128, %p129
    %s132 = sadd.s32 %s131, 1
    %p135 = scmp.eq.s32.totalorder %s13, 1
    %p136 = scmp.ne.s32.totalorder %s131, %s133
    %p137 = scmp.eq.s32.totalorder %s13, 0
    %p138 = por %p136, %p137
    %p139 = scmp.ne.s32.totalorder %s131, %s133
    %p140 = scmp.eq.s32.totalorder %s18, 1
    %p141 = por %p139, %p140
    %p142 = scmp.ne.s32.totalorder %s133, %s134
    %p143 = scmp.eq.s32.totalorder %s18, 0
    %p144 = por %p142, %p143
    %p145 = scmp.ne.s32.totalorder %s133, %s134
    %p146 = scmp.eq.s32.totalorder %s19, 1
    %p147 = por %p145, %p146
    %p149 = scmp.ne.s32.totalorder %s134, %s148
    %p150 = scmp.eq.s32.totalorder %s19, 0
    %p151 = por %p149, %p150
    %s153 = sadd.s32 %s152, 1
    %p156 = scmp.eq.s32.totalorder %s13, 1
    %p157 = scmp.ne.s32.totalorder %s152, %s154
    %p158 = scmp.eq.s32.totalorder %s13, 0
    %p159 = por %p157, %p158
    %p160 = scmp.ne.s32.totalorder %s152, %s154
    %p161 = scmp.eq.s32.totalorder %s18, 1
    %p162 = por %p160, %p161
    %p163 = scmp.ne.s32.totalorder %s154, %s155
    %p164 = scmp.eq.s32.totalorder %s18, 0
    %p165 = por %p163, %p164
    %p166 = scmp.ne.s32.totalorder %s154, %s155
    %p167 = scmp.eq.s32.totalorder %s19, 1
    %p168 = por %p166, %p167
    %p170 = scmp.ne.s32.totalorder %s155, %s169
    %p171 = scmp.eq.s32.totalorder %s19, 0
    %p172 = por %p170, %p171
    %s173 = ssub.s32 %s13, %s20
    %p174 = scmp.eq.s32.totalorder %s173, 0
    %s176 = sadd.s32 %s175, 1
    %s177 = scalar_select %p174, %s175, %s176
    %p180 = pneg %p174
    %p181 = scmp.eq.s32.totalorder %s13, 1
    %p182 = por %p180, %p181
    %p183 = scmp.ne.s32.totalorder %s175, %s178
    %p184 = scmp.eq.s32.totalorder %s13, 0
    %p185 = por %p183, %p184
    %p186 = scmp.ne.s32.totalorder %s175, %s178
    %p187 = scmp.eq.s32.totalorder %s18, 1
    %p188 = por %p186, %p187
    %p189 = scmp.ne.s32.totalorder %s178, %s179
    %p190 = scmp.eq.s32.totalorder %s18, 0
    %p191 = por %p189, %p190
    %p192 = scmp.ne.s32.totalorder %s178, %s179
    %p193 = scmp.eq.s32.totalorder %s19, 1
    %p194 = por %p192, %p193
    %p196 = scmp.ne.s32.totalorder %s179, %s195
    %p197 = scmp.eq.s32.totalorder %s19, 0
    %p198 = por %p196, %p197
    %p199 = scmp.le.s32.totalorder 1, %s13
    %p200 = scmp.lt.s32.totalorder %s13, 3
    %p201 = pnand %p199, %p200
    %p202 = pneg %p201
    // Predicated region
    $region9: #{dblock_forward.1} parent=5 // pred_check
      _
    $region10: #{dblock_forward.1} parent=5 // pred_check_branch
      %204 = sbr.rel (%p201) target = $region12
    $region11: #{dblock_forward.1} parent=5 // pred_region
      %s205 = ssub.s32 %s13, 1
      // Predicated region
      $region13: #{dblock_forward.1} parent=11 // pred_check
        %p206 = pneg %p60
      $region14: #{dblock_forward.1} parent=11 // pred_check_branch
        %208 = sbr.rel (%p206) target = $region16
      $region15: #{dblock_forward.1} parent=11 // pred_region
        _
      $region16: #{dblock_forward.1} parent=11 // pred_fallthru
        _
      // Predicated region
      $region17: #{dblock_forward.1} parent=11 // pred_check
        %p209 = pneg %p81
      $region18: #{dblock_forward.1} parent=11 // pred_check_branch
        %211 = sbr.rel (%p209) target = $region20
      $region19: #{dblock_forward.1} parent=11 // pred_region
        _
      $region20: #{dblock_forward.1} parent=11 // pred_fallthru
        _
      // Predicated region
      $region21: #{dblock_forward.1} parent=11 // pred_check
        %p212 = pneg %p102
      $region22: #{dblock_forward.1} parent=11 // pred_check_branch
        %214 = sbr.rel (%p212) target = $region24
      $region23: #{dblock_forward.1} parent=11 // pred_region
        _
      $region24: #{dblock_forward.1} parent=11 // pred_fallthru
        _
      // Predicated region
      $region25: #{dblock_forward.1} parent=11 // pred_check
        %p215 = pneg %p123
      $region26: #{dblock_forward.1} parent=11 // pred_check_branch
        %217 = sbr.rel (%p215) target = $region28
      $region27: #{dblock_forward.1} parent=11 // pred_region
        _
      $region28: #{dblock_forward.1} parent=11 // pred_fallthru
        _
      // Predicated region
      $region29: #{dblock_forward.1} parent=11 // pred_check
        %p218 = pneg %p144
      $region30: #{dblock_forward.1} parent=11 // pred_check_branch
        %220 = sbr.rel (%p218) target = $region32
      $region31: #{dblock_forward.1} parent=11 // pred_region
        _
      $region32: #{dblock_forward.1} parent=11 // pred_fallthru
        _
      // Predicated region
      $region33: #{dblock_forward.1} parent=11 // pred_check
        %p221 = pneg %p165
      $region34: #{dblock_forward.1} parent=11 // pred_check_branch
        %223 = sbr.rel (%p221) target = $region36
      $region35: #{dblock_forward.1} parent=11 // pred_region
        _
      $region36: #{dblock_forward.1} parent=11 // pred_fallthru
        _
    $region12: #{dblock_forward.1} parent=5 // pred_fallthru
      _
    %p224 = scmp.lt.s32.totalorder %s13, 2
    // Predicated region
    $region37: #{dblock_forward.1} parent=5 // pred_check
      %p225 = pneg %p224
    $region38: #{dblock_forward.1} parent=5 // pred_check_branch
      %227 = sbr.rel (%p225) target = $region40
    $region39: #{dblock_forward.1} parent=5 // pred_region
      // Predicated region
      $region41: #{dblock_forward.1} parent=39 // pred_check
        %p228 = pneg %p33
      $region42: #{dblock_forward.1} parent=39 // pred_check_branch
        %230 = sbr.rel (%p228) target = $region44
      $region43: #{dblock_forward.1} parent=39 // pred_region
        %s231 = smul.u32 2, %s13
        %p232 = scmp.lt.s32.totalorder %s231, 3
        %s233 = scalar_select %p232, %s231, 3
        %s234 = smul.addr %s233, 8
        %s235 = scalar_lea.vmem %s0, %s234
        %s236 = smul.u32 2, %s13
      $region44: #{dblock_forward.1} parent=39 // pred_fallthru
        _
    $region40: #{dblock_forward.1} parent=5 // pred_fallthru
      _
    %p237 = scmp.le.s32.totalorder 1, %s13
    %p238 = scmp.lt.s32.totalorder %s13, 3
    %p239 = pnand %p237, %p238
    %p240 = pneg %p239
    // Predicated region
    $region45: #{dblock_forward.1} parent=5 // pred_check
      _
    $region46: #{dblock_forward.1} parent=5 // pred_check_branch
      %242 = sbr.rel (%p239) target = $region48
    $region47: #{dblock_forward.1} parent=5 // pred_region
      %s243 = ssub.s32 %s13, 1
      %s244 = smul.u32 2, %s18
      %p245 = scmp.lt.s32.totalorder %s244, 3
      %s246 = scalar_select %p245, %s244, 3
      %s247 = smul.addr %s246, 8
      %s248 = scalar_lea.vmem %s0, %s247
      %p249 = pneg %p39
      %p250 = pneg %p36
      %p251 = pneg %p60
      %p252 = pneg %p57
      %p253 = pneg %p81
      %p254 = pneg %p78
      %p255 = pneg %p102
      %p256 = pneg %p99
      %p257 = pneg %p123
      %p258 = pneg %p120
      %p259 = pneg %p144
      %p260 = pneg %p141
      %p261 = pneg %p165
      %p262 = pneg %p162
      %p263 = pneg %p191
      %p264 = pneg %p188
      %s265 = smul.u32 2, %s18
      %p266 = scmp.lt.s32.totalorder %s265, 3
      %s267 = scalar_select %p266, %s265, 3
      %s268 = smul.addr %s267, 2
      %s269 = smul.addr %s268, 8
      %s270 = scalar_lea.vmem %s7, %s269
      %s271 = smul.u32 2, %s18
      %p272 = scmp.lt.s32.totalorder %s271, 3
      %s273 = scalar_select %p272, %s271, 3
      %s274 = smul.addr %s273, 8
      %s275 = scalar_lea.vmem %s0, %s274
      %s276 = smul.u32 2, %s18
      %s277 = smul.u32 2, %s18
      %p278 = scmp.lt.s32.totalorder %s277, 3
      %s279 = scalar_select %p278, %s277, 3
      %s280 = smul.addr %s279, 2
      %s281 = smul.addr %s280, 8
      %s282 = scalar_lea.vmem %s7, %s281
      %s283 = smul.u32 2, %s18
      %v284 = vld [vmem:[%s275] sm:$0xff]
      %v285 = vld [vmem:[%s275 + $0x8] sm:$0xff]
      %v286 = vld [vmem:[%s1] sm:$0xff]
      %v287 = vld [vmem:[%s1 + $0x8] sm:$0xff]
      %v288 = vld [vmem:[%s1 + $0x10] sm:$0xff]
      %v289 = vld [vmem:[%s1 + $0x18] sm:$0xff]
      %v290 = vld [vmem:[%s1 + $0x20] sm:$0xff]
      %v291 = vld [vmem:[%s1 + $0x28] sm:$0xff]
      %v292 = vld [vmem:[%s1 + $0x30] sm:$0xff]
      %v293 = vld [vmem:[%s1 + $0x38] sm:$0xff]
      %v294 = vld [vmem:[%s2] sm:$0x1]
      %v296 = vlaneseq
      %v297 = vshrl.u32 %v296, 7
      %v298 = vsub.s32 0, %v297
      %v299 = vrot.slane %v294, %v298
      %vm301 = vcmask 523264
      %v303 = vsel %vm301, %v284, 0
      %v306 = vsel %vm301, %v285, 0
      %308 = vmatprep.subr.mxu0 0.0
      %309 = vmatpush1.msra.mxu0 %v286
      %310 = vmatprep.subr.mxu0 0.0
      %311 = vmatpush1.msra.mxu0 %v287
      %312 = vmatprep.subr.mxu0 0.0
      %313 = vmatpush1.msra.mxu0 %v288
      %314 = vmatprep.subr.mxu0 0.0
      %315 = vmatpush1.msra.mxu0 %v289
      %316 = vmatprep.subr.mxu0 0.0
      %317 = vmatpush1.msra.mxu0 %v290
      %318 = vmatprep.subr.mxu0 0.0
      %319 = vmatpush1.msra.mxu0 %v291
      %320 = vmatprep.subr.mxu0 0.0
      %321 = vmatpush1.msra.mxu0 %v292
      %322 = vmatprep.subr.mxu0 0.0
      %323 = vmatpush1.msra.mxu0 %v293
      %324 = vmatprep.subr.mxu0 0.0
      %325 = vmatpush1.msra.mxu0 0.0
      %326 = vmatprep.subr.mxu0 0.0
      %327 = vmatpush1.msra.mxu0 0.0
      %328 = vmatprep.subr.mxu0 0.0
      %329 = vmatpush1.msra.mxu0 0.0
      %330 = vmatprep.subr.mxu0 0.0
      %331 = vmatpush1.msra.mxu0 0.0
      %332 = vmatprep.subr.mxu0 0.0
      %333 = vmatpush1.msra.mxu0 0.0
      %334 = vmatprep.subr.mxu0 0.0
      %335 = vmatpush1.msra.mxu0 0.0
      %336 = vmatprep.subr.mxu0 0.0
      %337 = vmatpush1.msra.mxu0 0.0
      %338 = vmatprep.subr.mxu0 0.0
      %339 = vmatpush1.msra.mxu0 0.0
      %340 = vmatprep.subr.mxu0 0.0
      %341 = vmatpush1.msra.mxu0 0.0
      %342 = vmatprep.subr.mxu0 0.0
      %343 = vmatpush1.msra.mxu0 0.0
      %344 = vmatprep.subr.mxu0 0.0
      %345 = vmatpush1.msra.mxu0 0.0
      %346 = vmatprep.subr.mxu0 0.0
      %347 = vmatpush1.msra.mxu0 0.0
      %348 = vmatprep.subr.mxu0 0.0
      %349 = vmatpush1.msra.mxu0 0.0
      %350 = vmatprep.subr.mxu0 0.0
      %351 = vmatpush1.msra.mxu0 0.0
      %352 = vmatprep.subr.mxu0 0.0
      %353 = vmatpush1.msra.mxu0 0.0
      %354 = vmatprep.subr.mxu0 0.0
      %355 = vmatpush1.msra.mxu0 0.0
      %356 = vmatprep.subr.mxu0 0.0
      %357 = vmatpush1.msra.mxu0 0.0
      %358 = vmatprep.subr.mxu0 0.0
      %359 = vmatpush1.msra.mxu0 0.0
      %360 = vmatprep.subr.mxu0 0.0
      %361 = vmatpush1.msra.mxu0 0.0
      %362 = vmatprep.subr.mxu0 0.0
      %363 = vmatpush1.msra.mxu0 0.0
      %364 = vmatprep.subr.mxu0 0.0
      %365 = vmatpush1.msra.mxu0 0.0
      %366 = vmatprep.subr.mxu0 0.0
      %367 = vmatpush1.msra.mxu0 0.0
      %368 = vmatprep.subr.mxu0 0.0
      %369 = vmatpush1.msra.mxu0 0.0
      %370 = vmatprep.subr.mxu0 0.0
      %371 = vmatpush1.msra.mxu0 0.0
      %372 = vmatprep.mubr.f32.mxu0 0.0
      %373 = vmatmul.mubr.f32.gmra.mrb[0].mxu0 %v303
      %v374 = vpop.f32.mrb[0].mxu0
      %v375 = vadd.f32 %v299, %v374
      %v376 = vpop.f32.mrb[0].mxu0
      %377 = vmatprep.mubr.f32.mxu0 0.0
      %378 = vmatmul.mubr.f32.gmra.mrb[0].mxu0 %v306
      %v379 = vpop.f32.mrb[0].mxu0
      %v380 = vadd.f32 %v299, %v379
      %v381 = vpop.f32.mrb[0].mxu0
      %382 = vdwg.mxu0
      %vm383 = vcmp.ge.f32.partialorder %v375, 0.0
      %vm384 = vcmp.ge.f32.partialorder %v380, 0.0
      %v385 = vmul.f32 %v375, 0.2
      %v386 = vmul.f32 %v380, 0.2
      %v387 = vsel %vm383, %v375, %v385
      %v388 = vsel %vm384, %v380, %v386
      %v389 = vlaneseq
      %vm390 = vcmp.ge.s32.totalorder %v389, 0
      %vm391 = vcmp.lt.s32.totalorder %v389, 144
      %vm392 = vmand %vm390, %vm391
      %393 = vst.msk [vmem:[#allocation2] ss:$8 sm:$0x3] %vm392, 0.0
      %394 = vst.msk [vmem:[#allocation2] ss:$8 sm:$0x0] %vm392, 0.0
      %s395 = scalar_lea.vmem [#allocation2], 33
      %396 = vst.msk [vmem:[%s395] ss:$8 sm:$0x3] %vm392, 0.0
      %397 = vst.msk [vmem:[%s395] ss:$8 sm:$0x0] %vm392, 0.0
      %vm398 = vcmask 64512
      %399 = vst.msk [vmem:[#allocation2] sm:$0xff] %vm398, 0.0
      %400 = vst.msk [vmem:[#allocation2 + $0x10] sm:$0xff] %vm398, 0.0
      %vm401 = vcmask 58368
      %402 = vst.msk [vmem:[#allocation2 + $0x20] sm:$0x3] %vm401, 0.0
      %vm403 = vcmask 130112
      %404 = vst.msk [vmem:[#allocation2 + $0x8] sm:$0xff] %vm403, 0.0
      %405 = vst.msk [vmem:[#allocation2 + $0x18] sm:$0xff] %vm403, 0.0
      %vm406 = vcmask 123968
      %407 = vst.msk [vmem:[#allocation2 + $0x28] sm:$0x3] %vm406, 0.0
      %vm410 = vcmask 1040384
      %v411 = vrot.slane %v387, 7
      %v412 = vrot.slane %v388, 7
      %v413 = vsel %vm410, %v411, %v412
      %414 = vrot.lane.b32.xlu0 %v411, 8
      %v415 = vpop.permute.xlu0 %414
      %416 = vrot.lane.b32.xlu0 %v413, 8
      %v417 = vpop.permute.xlu0 %416
      %418 = vrot.lane.b32.xlu0 %v412, 8
      %v419 = vpop.permute.xlu0 %418
      %vm423 = vcmask 1047617
      %424 = vst.msk [vmem:[#allocation2] sm:$0xfe] %vm423, %v415
      %vm425 = vcmask 64513
      %426 = vst.msk [vmem:[#allocation2 + $0x8] sm:$0xfe] %vm425, %v415
      %vm427 = vcmask 1047616
      %428 = vst.msk [vmem:[#allocation2 + $0x10] sm:$0xff] %vm427, %v417
      %429 = vst.msk [vmem:[#allocation2 + $0x18] sm:$0xff] %vm398, %v417
      %vm430 = vcmask 1040448
      %431 = vst.msk [vmem:[#allocation2 + $0x20] sm:$0x1] %vm430, %v419
      %vm432 = vcmask 57344
      %433 = vst.msk [vmem:[#allocation2 + $0x28] sm:$0x1] %vm432, %v419
      %v434 = vld [vmem:[%s4] sm:$0x7]
      %v435 = vld [vmem:[#allocation2] sm:$0xff]
      %v436 = vld [vmem:[#allocation2 + $0x8] sm:$0xff]
      %v437 = vld [vmem:[#allocation2 + $0x10] sm:$0xff]
      %v438 = vld [vmem:[#allocation2 + $0x18] sm:$0xff]
      %v439 = vld [vmem:[%s3] sm:$0xff]
      %v440 = vld [vmem:[%s3 + $0x8] sm:$0xff]
      %v441 = vld [vmem:[%s3 + $0x10] sm:$0xff]
      %v442 = vld [vmem:[%s3 + $0x18] sm:$0xff]
      %v443 = vld [vmem:[%s3 + $0x20] sm:$0xff]
      %v444 = vld [vmem:[%s3 + $0x28] sm:$0xff]
      %v445 = vld [vmem:[%s3 + $0x30] sm:$0xff]
      %v446 = vld [vmem:[%s3 + $0x38] sm:$0xff]
      %v447 = vld [vmem:[%s3 + $0x40] sm:$0xff]
      %v448 = vld [vmem:[%s3 + $0x48] sm:$0xff]
      %v449 = vld [vmem:[%s3 + $0x50] sm:$0xff]
      %v450 = vld [vmem:[%s3 + $0x58] sm:$0xff]
      %v451 = vld [vmem:[%s3 + $0x60] sm:$0xff]
      %v452 = vld [vmem:[%s3 + $0x68] sm:$0xff]
      %v453 = vld [vmem:[%s3 + $0x70] sm:$0xff]
      %v454 = vld [vmem:[%s3 + $0x78] sm:$0xff]
      %v455 = vld [vmem:[%s3 + $0x80] sm:$0xff]
      %v456 = vld [vmem:[%s3 + $0x88] sm:$0xff]
      %v457 = vld [vmem:[%s3 + $0x90] sm:$0xff]
      %v458 = vld [vmem:[%s3 + $0x98] sm:$0xff]
      %v459 = vld [vmem:[%s3 + $0xa0] sm:$0xff]
      %v460 = vld [vmem:[%s3 + $0xa8] sm:$0xff]
      %v461 = vld [vmem:[%s3 + $0xb0] sm:$0xff]
      %v462 = vld [vmem:[%s3 + $0xb8] sm:$0xff]
      %v463 = vld [vmem:[%s3 + $0xc0] sm:$0xff]
      %v464 = vld [vmem:[%s3 + $0xc8] sm:$0xff]
      %v465 = vld [vmem:[%s3 + $0xd0] sm:$0xff]
      %v466 = vld [vmem:[%s3 + $0xd8] sm:$0xff]
      %v467 = vld [vmem:[%s3 + $0xe0] sm:$0xff]
      %v468 = vld [vmem:[%s3 + $0xe8] sm:$0xff]
      %v469 = vld [vmem:[%s3 + $0xf0] sm:$0xff]
      %v470 = vld [vmem:[%s3 + $0xf8] sm:$0xff]
      %v471 = vld [vmem:[%s3 + $0x100] sm:$0xff]
      %v472 = vld [vmem:[%s3 + $0x108] sm:$0xff]
      %v473 = vld [vmem:[%s3 + $0x110] sm:$0xff]
      %v474 = vld [vmem:[%s3 + $0x118] sm:$0xff]
      %v475 = vld [vmem:[%s3 + $0x120] sm:$0xff]
      %v476 = vld [vmem:[%s3 + $0x128] sm:$0xff]
      %v477 = vld [vmem:[%s3 + $0x130] sm:$0xff]
      %v478 = vld [vmem:[%s3 + $0x138] sm:$0xff]
      %v479 = vld [vmem:[%s3 + $0x140] sm:$0xff]
      %v480 = vld [vmem:[%s3 + $0x148] sm:$0xff]
      %v481 = vld [vmem:[%s3 + $0x150] sm:$0xff]
      %v482 = vld [vmem:[%s3 + $0x158] sm:$0xff]
      %v483 = vld [vmem:[%s3 + $0x160] sm:$0xff]
      %v484 = vld [vmem:[%s3 + $0x168] sm:$0xff]
      %v485 = vld [vmem:[%s3 + $0x170] sm:$0xff]
      %v486 = vld [vmem:[%s3 + $0x178] sm:$0xff]
      %v487 = vld [vmem:[%s3 + $0x180] sm:$0xff]
      %v488 = vld [vmem:[%s3 + $0x188] sm:$0xff]
      %v489 = vld [vmem:[%s3 + $0x190] sm:$0xff]
      %v490 = vld [vmem:[%s3 + $0x198] sm:$0xff]
      %v491 = vld [vmem:[%s3 + $0x1a0] sm:$0xff]
      %v492 = vld [vmem:[%s3 + $0x1a8] sm:$0xff]
      %vm493 = vcmask 130048
      %v495 = vsel %vm493, %v436, 0
      %v498 = vsel %vm493, %v438, 0
      %500 = vmatprep.subr.mxu0 %v440
      %501 = vmatpush1.msra.mxu0 %v439
      %502 = vmatprep.subr.mxu0 %v443
      %503 = vmatpush1.msra.mxu0 %v442
      %504 = vmatprep.subr.mxu0 %v446
      %505 = vmatpush1.msra.mxu0 %v445
      %506 = vmatprep.subr.mxu0 %v449
      %507 = vmatpush1.msra.mxu0 %v448
      %508 = vmatprep.subr.mxu0 %v452
      %509 = vmatpush1.msra.mxu0 %v451
      %510 = vmatprep.subr.mxu0 %v455
      %511 = vmatpush1.msra.mxu0 %v454
      %512 = vmatprep.subr.mxu0 %v458
      %513 = vmatpush1.msra.mxu0 %v457
      %514 = vmatprep.subr.mxu0 %v461
      %515 = vmatpush1.msra.mxu0 %v460
      %516 = vmatprep.subr.mxu0 %v464
      %517 = vmatpush1.msra.mxu0 %v463
      %518 = vmatprep.subr.mxu0 %v467
      %519 = vmatpush1.msra.mxu0 %v466
      %520 = vmatprep.subr.mxu0 %v470
      %521 = vmatpush1.msra.mxu0 %v469
      %522 = vmatprep.subr.mxu0 %v473
      %523 = vmatpush1.msra.mxu0 %v472
      %524 = vmatprep.subr.mxu0 %v476
      %525 = vmatpush1.msra.mxu0 %v475
      %526 = vmatprep.subr.mxu0 %v479
      %527 = vmatpush1.msra.mxu0 %v478
      %528 = vmatprep.subr.mxu0 %v482
      %529 = vmatpush1.msra.mxu0 %v481
      %530 = vmatprep.subr.mxu0 %v485
      %531 = vmatpush1.msra.mxu0 %v484
      %532 = vmatprep.subr.mxu0 %v488
      %533 = vmatpush1.msra.mxu0 %v487
      %534 = vmatprep.subr.mxu0 %v491
      %535 = vmatpush1.msra.mxu0 %v490
      %536 = vmatprep.subr.mxu0 0.0
      %537 = vmatpush1.msra.mxu0 0.0
      %538 = vmatprep.subr.mxu0 0.0
      %539 = vmatpush1.msra.mxu0 0.0
      %540 = vmatprep.subr.mxu0 0.0
      %541 = vmatpush1.msra.mxu0 0.0
      %542 = vmatprep.subr.mxu0 0.0
      %543 = vmatpush1.msra.mxu0 0.0
      %544 = vmatprep.subr.mxu0 0.0
      %545 = vmatpush1.msra.mxu0 0.0
      %546 = vmatprep.subr.mxu0 0.0
      %547 = vmatpush1.msra.mxu0 0.0
      %548 = vmatprep.subr.mxu0 0.0
      %549 = vmatpush1.msra.mxu0 0.0
      %550 = vmatprep.subr.mxu0 0.0
      %551 = vmatpush1.msra.mxu0 0.0
      %552 = vmatprep.subr.mxu0 0.0
      %553 = vmatpush1.msra.mxu0 0.0
      %554 = vmatprep.subr.mxu0 0.0
      %555 = vmatpush1.msra.mxu0 0.0
      %556 = vmatprep.subr.mxu0 0.0
      %557 = vmatpush1.msra.mxu0 0.0
      %558 = vmatprep.subr.mxu0 0.0
      %559 = vmatpush1.msra.mxu0 0.0
      %560 = vmatprep.subr.mxu0 0.0
      %561 = vmatpush1.msra.mxu0 0.0
      %562 = vmatprep.subr.mxu0 0.0
      %563 = vmatpush1.msra.mxu0 0.0
      %564 = vmatprep.mubr.f32.mxu0 %v495
      %565 = vmatmul.mubr.f32.gmra.mrb[0].mxu0 %v435
      %v566 = vpop.f32.mrb[0].mxu0
      %v567 = vadd.f32 0.0, %v566
      %v568 = vpop.f32.mrb[0].mxu0
      %v569 = vadd.f32 0.0, %v568
      %570 = vmatprep.mubr.f32.mxu0 %v498
      %571 = vmatmul.mubr.f32.gmra.mrb[0].mxu0 %v437
      %v572 = vpop.f32.mrb[0].mxu0
      %v573 = vadd.f32 0.0, %v572
      %v574 = vpop.f32.mrb[0].mxu0
      %v575 = vadd.f32 0.0, %v574
      %576 = vdwg.mxu0
      %577 = vmatprep.subr.mxu0 0.0
      %578 = vmatpush1.msra.mxu0 %v441
      %579 = vmatprep.subr.mxu0 0.0
      %580 = vmatpush1.msra.mxu0 %v444
      %581 = vmatprep.subr.mxu0 0.0
      %582 = vmatpush1.msra.mxu0 %v447
      %583 = vmatprep.subr.mxu0 0.0
      %584 = vmatpush1.msra.mxu0 %v450
      %585 = vmatprep.subr.mxu0 0.0
      %586 = vmatpush1.msra.mxu0 %v453
      %587 = vmatprep.subr.mxu0 0.0
      %588 = vmatpush1.msra.mxu0 %v456
      %589 = vmatprep.subr.mxu0 0.0
      %590 = vmatpush1.msra.mxu0 %v459
      %591 = vmatprep.subr.mxu0 0.0
      %592 = vmatpush1.msra.mxu0 %v462
      %593 = vmatprep.subr.mxu0 0.0
      %594 = vmatpush1.msra.mxu0 %v465
      %595 = vmatprep.subr.mxu0 0.0
      %596 = vmatpush1.msra.mxu0 %v468
      %597 = vmatprep.subr.mxu0 0.0
      %598 = vmatpush1.msra.mxu0 %v471
      %599 = vmatprep.subr.mxu0 0.0
      %600 = vmatpush1.msra.mxu0 %v474
      %601 = vmatprep.subr.mxu0 0.0
      %602 = vmatpush1.msra.mxu0 %v477
      %603 = vmatprep.subr.mxu0 0.0
      %604 = vmatpush1.msra.mxu0 %v480
      %605 = vmatprep.subr.mxu0 0.0
      %606 = vmatpush1.msra.mxu0 %v483
      %607 = vmatprep.subr.mxu0 0.0
      %608 = vmatpush1.msra.mxu0 %v486
      %609 = vmatprep.subr.mxu0 0.0
      %610 = vmatpush1.msra.mxu0 %v489
      %611 = vmatprep.subr.mxu0 0.0
      %612 = vmatpush1.msra.mxu0 %v492
      %613 = vmatprep.subr.mxu0 0.0
      %614 = vmatpush1.msra.mxu0 0.0
      %615 = vmatprep.subr.mxu0 0.0
      %616 = vmatpush1.msra.mxu0 0.0
      %617 = vmatprep.subr.mxu0 0.0
      %618 = vmatpush1.msra.mxu0 0.0
      %619 = vmatprep.subr.mxu0 0.0
      %620 = vmatpush1.msra.mxu0 0.0
      %621 = vmatprep.subr.mxu0 0.0
      %622 = vmatpush1.msra.mxu0 0.0
      %623 = vmatprep.subr.mxu0 0.0
      %624 = vmatpush1.msra.mxu0 0.0
      %625 = vmatprep.subr.mxu0 0.0
      %626 = vmatpush1.msra.mxu0 0.0
      %627 = vmatprep.subr.mxu0 0.0
      %628 = vmatpush1.msra.mxu0 0.0
      %629 = vmatprep.subr.mxu0 0.0
      %630 = vmatpush1.msra.mxu0 0.0
      %631 = vmatprep.subr.mxu0 0.0
      %632 = vmatpush1.msra.mxu0 0.0
      %633 = vmatprep.subr.mxu0 0.0
      %634 = vmatpush1.msra.mxu0 0.0
      %635 = vmatprep.subr.mxu0 0.0
      %636 = vmatpush1.msra.mxu0 0.0
      %637 = vmatprep.subr.mxu0 0.0
      %638 = vmatpush1.msra.mxu0 0.0
      %639 = vmatprep.subr.mxu0 0.0
      %640 = vmatpush1.msra.mxu0 0.0
      %641 = vmatprep.mubr.f32.mxu0 %v495
      %642 = vmatmul.mubr.f32.gmra.mrb[0].mxu0 %v435
      %v643 = vpop.f32.mrb[0].mxu0
      %v644 = vadd.f32 0.0, %v643
      %v645 = vpop.f32.mrb[0].mxu0
      %646 = vmatprep.mubr.f32.mxu0 %v498
      %647 = vmatmul.mubr.f32.gmra.mrb[0].mxu0 %v437
      %v648 = vpop.f32.mrb[0].mxu0
      %v649 = vadd.f32 0.0, %v648
      %v650 = vpop.f32.mrb[0].mxu0
      %651 = vdwg.mxu0
      %v653 = vlaneseq
      %v654 = vshrl.u32 %v653, 7
      %v655 = vsub.s32 0, %v654
      %v656 = vrot.slane %v434, %v655
      %v657 = vlaneseq
      %v658 = vshrl.u32 %v657, 7
      %v659 = vsub.s32 1, %v658
      %v660 = vrot.slane %v434, %v659
      %v661 = vlaneseq
      %v662 = vshrl.u32 %v661, 7
      %v663 = vsub.s32 2, %v662
      %v664 = vrot.slane %v434, %v663
      %v668 = vadd.f32 %v656, %v567
      %v669 = vadd.f32 %v660, %v569
      %v670 = vadd.f32 %v664, %v644
      %v671 = vadd.f32 %v656, %v573
      %v672 = vadd.f32 %v660, %v575
      %v673 = vadd.f32 %v664, %v649
      %v674 = vld [vmem:[#allocation2] sm:$0xfe]
      %v675 = vld [vmem:[#allocation2 + $0x8] sm:$0xfe]
      %v676 = vld [vmem:[#allocation2 + $0x10] sm:$0xff]
      %v677 = vld [vmem:[#allocation2 + $0x18] sm:$0xff]
      %v678 = vld [vmem:[#allocation2 + $0x20] sm:$0x1]
      %v679 = vld [vmem:[#allocation2 + $0x28] sm:$0x1]
      %s680 = scalar_lea.vmem %s3, 432
      %v681 = vld [vmem:[%s680] sm:$0xff]
      %v682 = vld [vmem:[%s680 + $0x8] sm:$0xff]
      %v683 = vld [vmem:[%s680 + $0x10] sm:$0xff]
      %v684 = vld [vmem:[%s680 + $0x18] sm:$0xff]
      %v685 = vld [vmem:[%s680 + $0x20] sm:$0xff]
      %v686 = vld [vmem:[%s680 + $0x28] sm:$0xff]
      %v687 = vld [vmem:[%s680 + $0x30] sm:$0xff]
      %v688 = vld [vmem:[%s680 + $0x38] sm:$0xff]
      %v689 = vld [vmem:[%s680 + $0x40] sm:$0xff]
      %v690 = vld [vmem:[%s680 + $0x48] sm:$0xff]
      %v691 = vld [vmem:[%s680 + $0x50] sm:$0xff]
      %v692 = vld [vmem:[%s680 + $0x58] sm:$0xff]
      %v693 = vld [vmem:[%s680 + $0x60] sm:$0xff]
      %v694 = vld [vmem:[%s680 + $0x68] sm:$0xff]
      %v695 = vld [vmem:[%s680 + $0x70] sm:$0xff]
      %v696 = vld [vmem:[%s680 + $0x78] sm:$0xff]
      %v697 = vld [vmem:[%s680 + $0x80] sm:$0xff]
      %v698 = vld [vmem:[%s680 + $0x88] sm:$0xff]
      %v699 = vld [vmem:[%s680 + $0x90] sm:$0xff]
      %v700 = vld [vmem:[%s680 + $0x98] sm:$0xff]
      %v701 = vld [vmem:[%s680 + $0xa0] sm:$0xff]
      %v702 = vld [vmem:[%s680 + $0xa8] sm:$0xff]
      %v703 = vld [vmem:[%s680 + $0xb0] sm:$0xff]
      %v704 = vld [vmem:[%s680 + $0xb8] sm:$0xff]
      %v705 = vld [vmem:[%s680 + $0xc0] sm:$0xff]
      %v706 = vld [vmem:[%s680 + $0xc8] sm:$0xff]
      %v707 = vld [vmem:[%s680 + $0xd0] sm:$0xff]
      %v708 = vld [vmem:[%s680 + $0xd8] sm:$0xff]
      %v709 = vld [vmem:[%s680 + $0xe0] sm:$0xff]
      %v710 = vld [vmem:[%s680 + $0xe8] sm:$0xff]
      %v711 = vld [vmem:[%s680 + $0xf0] sm:$0xff]
      %v712 = vld [vmem:[%s680 + $0xf8] sm:$0xff]
      %v713 = vld [vmem:[%s680 + $0x100] sm:$0xff]
      %v714 = vld [vmem:[%s680 + $0x108] sm:$0xff]
      %v715 = vld [vmem:[%s680 + $0x110] sm:$0xff]
      %v716 = vld [vmem:[%s680 + $0x118] sm:$0xff]
      %v717 = vld [vmem:[%s680 + $0x120] sm:$0xff]
      %v718 = vld [vmem:[%s680 + $0x128] sm:$0xff]
      %v719 = vld [vmem:[%s680 + $0x130] sm:$0xff]
      %v720 = vld [vmem:[%s680 + $0x138] sm:$0xff]
      %v721 = vld [vmem:[%s680 + $0x140] sm:$0xff]
      %v722 = vld [vmem:[%s680 + $0x148] sm:$0xff]
      %v723 = vld [vmem:[%s680 + $0x150] sm:$0xff]
      %v724 = vld [vmem:[%s680 + $0x158] sm:$0xff]
      %v725 = vld [vmem:[%s680 + $0x160] sm:$0xff]
      %v726 = vld [vmem:[%s680 + $0x168] sm:$0xff]
      %v727 = vld [vmem:[%s680 + $0x170] sm:$0xff]
      %v728 = vld [vmem:[%s680 + $0x178] sm:$0xff]
      %v729 = vld [vmem:[%s680 + $0x180] sm:$0xff]
      %v730 = vld [vmem:[%s680 + $0x188] sm:$0xff]
      %v731 = vld [vmem:[%s680 + $0x190] sm:$0xff]
      %v732 = vld [vmem:[%s680 + $0x198] sm:$0xff]
      %v733 = vld [vmem:[%s680 + $0x1a0] sm:$0xff]
      %v734 = vld [vmem:[%s680 + $0x1a8] sm:$0xff]
      %vm741 = vcmask 1046528
      %v742 = vrot.slane %v674, 1
      %v743 = vrot.slane %v676, 1
      %v744 = vsel %vm741, %v742, %v743
      %v745 = vrot.slane %v675, 1
      %v746 = vrot.slane %v677, 1
      %v747 = vsel %vm741, %v745, %v746
      %v748 = vrot.slane %v678, 1
      %v749 = vsel %vm741, %v743, %v748
      %v750 = vrot.slane %v679, 1
      %v751 = vsel %vm741, %v746, %v750
      %v754 = vsel %vm493, %v747, 0
      %v756 = vsel %vm493, %v751, 0
      %758 = vmatprep.subr.mxu0 %v682
      %759 = vmatpush1.msra.mxu0 %v681
      %760 = vmatprep.subr.mxu0 %v685
      %761 = vmatpush1.msra.mxu0 %v684
      %762 = vmatprep.subr.mxu0 %v688
      %763 = vmatpush1.msra.mxu0 %v687
      %764 = vmatprep.subr.mxu0 %v691
      %765 = vmatpush1.msra.mxu0 %v690
      %766 = vmatprep.subr.mxu0 %v694
      %767 = vmatpush1.msra.mxu0 %v693
      %768 = vmatprep.subr.mxu0 %v697
      %769 = vmatpush1.msra.mxu0 %v696
      %770 = vmatprep.subr.mxu0 %v700
      %771 = vmatpush1.msra.mxu0 %v699
      %772 = vmatprep.subr.mxu0 %v703
      %773 = vmatpush1.msra.mxu0 %v702
      %774 = vmatprep.subr.mxu0 %v706
      %775 = vmatpush1.msra.mxu0 %v705
      %776 = vmatprep.subr.mxu0 %v709
      %777 = vmatpush1.msra.mxu0 %v708
      %778 = vmatprep.subr.mxu0 %v712
      %779 = vmatpush1.msra.mxu0 %v711
      %780 = vmatprep.subr.mxu0 %v715
      %781 = vmatpush1.msra.mxu0 %v714
      %782 = vmatprep.subr.mxu0 %v718
      %783 = vmatpush1.msra.mxu0 %v717
      %784 = vmatprep.subr.mxu0 %v721
      %785 = vmatpush1.msra.mxu0 %v720
      %786 = vmatprep.subr.mxu0 %v724
      %787 = vmatpush1.msra.mxu0 %v723
      %788 = vmatprep.subr.mxu0 %v727
      %789 = vmatpush1.msra.mxu0 %v726
      %790 = vmatprep.subr.mxu0 %v730
      %791 = vmatpush1.msra.mxu0 %v729
      %792 = vmatprep.subr.mxu0 %v733
      %793 = vmatpush1.msra.mxu0 %v732
      %794 = vmatprep.subr.mxu0 0.0
      %795 = vmatpush1.msra.mxu0 0.0
      %796 = vmatprep.subr.mxu0 0.0
      %797 = vmatpush1.msra.mxu0 0.0
      %798 = vmatprep.subr.mxu0 0.0
      %799 = vmatpush1.msra.mxu0 0.0
      %800 = vmatprep.subr.mxu0 0.0
      %801 = vmatpush1.msra.mxu0 0.0
      %802 = vmatprep.subr.mxu0 0.0
      %803 = vmatpush1.msra.mxu0 0.0
      %804 = vmatprep.subr.mxu0 0.0
      %805 = vmatpush1.msra.mxu0 0.0
      %806 = vmatprep.subr.mxu0 0.0
      %807 = vmatpush1.msra.mxu0 0.0
      %808 = vmatprep.subr.mxu0 0.0
      %809 = vmatpush1.msra.mxu0 0.0
      %810 = vmatprep.subr.mxu0 0.0
      %811 = vmatpush1.msra.mxu0 0.0
      %812 = vmatprep.subr.mxu0 0.0
      %813 = vmatpush1.msra.mxu0 0.0
      %814 = vmatprep.subr.mxu0 0.0
      %815 = vmatpush1.msra.mxu0 0.0
      %816 = vmatprep.subr.mxu0 0.0
      %817 = vmatpush1.msra.mxu0 0.0
      %818 = vmatprep.subr.mxu0 0.0
      %819 = vmatpush1.msra.mxu0 0.0
      %820 = vmatprep.subr.mxu0 0.0
      %821 = vmatpush1.msra.mxu0 0.0
      %822 = vmatprep.mubr.f32.mxu0 %v754
      %823 = vmatmul.mubr.f32.gmra.mrb[0].mxu0 %v744
      %v824 = vpop.f32.mrb[0].mxu0
      %v825 = vadd.f32 0.0, %v824
      %v826 = vpop.f32.mrb[0].mxu0
      %v827 = vadd.f32 0.0, %v826
      %828 = vmatprep.mubr.f32.mxu0 %v756
      %829 = vmatmul.mubr.f32.gmra.mrb[0].mxu0 %v749
      %v830 = vpop.f32.mrb[0].mxu0
      %v831 = vadd.f32 0.0, %v830
      %v832 = vpop.f32.mrb[0].mxu0
      %v833 = vadd.f32 0.0, %v832
      %834 = vdwg.mxu0
      %835 = vmatprep.subr.mxu0 0.0
      %836 = vmatpush1.msra.mxu0 %v683
      %837 = vmatprep.subr.mxu0 0.0
      %838 = vmatpush1.msra.mxu0 %v686
      %839 = vmatprep.subr.mxu0 0.0
      %840 = vmatpush1.msra.mxu0 %v689
      %841 = vmatprep.subr.mxu0 0.0
      %842 = vmatpush1.msra.mxu0 %v692
      %843 = vmatprep.subr.mxu0 0.0
      %844 = vmatpush1.msra.mxu0 %v695
      %845 = vmatprep.subr.mxu0 0.0
      %846 = vmatpush1.msra.mxu0 %v698
      %847 = vmatprep.subr.mxu0 0.0
      %848 = vmatpush1.msra.mxu0 %v701
      %849 = vmatprep.subr.mxu0 0.0
      %850 = vmatpush1.msra.mxu0 %v704
      %851 = vmatprep.subr.mxu0 0.0
      %852 = vmatpush1.msra.mxu0 %v707
      %853 = vmatprep.subr.mxu0 0.0
      %854 = vmatpush1.msra.mxu0 %v710
      %855 = vmatprep.subr.mxu0 0.0
      %856 = vmatpush1.msra.mxu0 %v713
      %857 = vmatprep.subr.mxu0 0.0
      %858 = vmatpush1.msra.mxu0 %v716
      %859 = vmatprep.subr.mxu0 0.0
      %860 = vmatpush1.msra.mxu0 %v719
      %861 = vmatprep.subr.mxu0 0.0
      %862 = vmatpush1.msra.mxu0 %v722
      %863 = vmatprep.subr.mxu0 0.0
      %864 = vmatpush1.msra.mxu0 %v725
      %865 = vmatprep.subr.mxu0 0.0
      %866 = vmatpush1.msra.mxu0 %v728
      %867 = vmatprep.subr.mxu0 0.0
      %868 = vmatpush1.msra.mxu0 %v731
      %869 = vmatprep.subr.mxu0 0.0
      %870 = vmatpush1.msra.mxu0 %v734
      %871 = vmatprep.subr.mxu0 0.0
      %872 = vmatpush1.msra.mxu0 0.0
      %873 = vmatprep.subr.mxu0 0.0
      %874 = vmatpush1.msra.mxu0 0.0
      %875 = vmatprep.subr.mxu0 0.0
      %876 = vmatpush1.msra.mxu0 0.0
      %877 = vmatprep.subr.mxu0 0.0
      %878 = vmatpush1.msra.mxu0 0.0
      %879 = vmatprep.subr.mxu0 0.0
      %880 = vmatpush1.msra.mxu0 0.0
      %881 = vmatprep.subr.mxu0 0.0
      %882 = vmatpush1.msra.mxu0 0.0
      %883 = vmatprep.subr.mxu0 0.0
      %884 = vmatpush1.msra.mxu0 0.0
      %885 = vmatprep.subr.mxu0 0.0
      %886 = vmatpush1.msra.mxu0 0.0
      %887 = vmatprep.subr.mxu0 0.0
      %888 = vmatpush1.msra.mxu0 0.0
      %889 = vmatprep.subr.mxu0 0.0
      %890 = vmatpush1.msra.mxu0 0.0
      %891 = vmatprep.subr.mxu0 0.0
      %892 = vmatpush1.msra.mxu0 0.0
      %893 = vmatprep.subr.mxu0 0.0
      %894 = vmatpush1.msra.mxu0 0.0
      %895 = vmatprep.subr.mxu0 0.0
      %896 = vmatpush1.msra.mxu0 0.0
      %897 = vmatprep.subr.mxu0 0.0
      %898 = vmatpush1.msra.mxu0 0.0
      %899 = vmatprep.mubr.f32.mxu0 %v754
      %900 = vmatmul.mubr.f32.gmra.mrb[0].mxu0 %v744
      %v901 = vpop.f32.mrb[0].mxu0
      %v902 = vadd.f32 0.0, %v901
      %v903 = vpop.f32.mrb[0].mxu0
      %904 = vmatprep.mubr.f32.mxu0 %v756
      %905 = vmatmul.mubr.f32.gmra.mrb[0].mxu0 %v749
      %v906 = vpop.f32.mrb[0].mxu0
      %v907 = vadd.f32 0.0, %v906
      %v908 = vpop.f32.mrb[0].mxu0
      %909 = vdwg.mxu0
      %v910 = vadd.f32 %v668, %v825
      %v911 = vadd.f32 %v669, %v827
      %v912 = vadd.f32 %v670, %v902
      %v913 = vadd.f32 %v671, %v831
      %v914 = vadd.f32 %v672, %v833
      %v915 = vadd.f32 %v673, %v907
      %v916 = vld [vmem:[#allocation2] sm:$0xfc]
      %v917 = vld [vmem:[#allocation2 + $0x8] sm:$0xfc]
      %v918 = vld [vmem:[#allocation2 + $0x20] sm:$0x3]
      %v919 = vld [vmem:[#allocation2 + $0x28] sm:$0x3]
      %s920 = scalar_lea.vmem %s3, 864
      %v921 = vld [vmem:[%s920] sm:$0xff]
      %v922 = vld [vmem:[%s920 + $0x8] sm:$0xff]
      %v923 = vld [vmem:[%s920 + $0x10] sm:$0xff]
      %v924 = vld [vmem:[%s920 + $0x18] sm:$0xff]
      %v925 = vld [vmem:[%s920 + $0x20] sm:$0xff]
      %v926 = vld [vmem:[%s920 + $0x28] sm:$0xff]
      %v927 = vld [vmem:[%s920 + $0x30] sm:$0xff]
      %v928 = vld [vmem:[%s920 + $0x38] sm:$0xff]
      %v929 = vld [vmem:[%s920 + $0x40] sm:$0xff]
      %v930 = vld [vmem:[%s920 + $0x48] sm:$0xff]
      %v931 = vld [vmem:[%s920 + $0x50] sm:$0xff]
      %v932 = vld [vmem:[%s920 + $0x58] sm:$0xff]
      %v933 = vld [vmem:[%s920 + $0x60] sm:$0xff]
      %v934 = vld [vmem:[%s920 + $0x68] sm:$0xff]
      %v935 = vld [vmem:[%s920 + $0x70] sm:$0xff]
      %v936 = vld [vmem:[%s920 + $0x78] sm:$0xff]
      %v937 = vld [vmem:[%s920 + $0x80] sm:$0xff]
      %v938 = vld [vmem:[%s920 + $0x88] sm:$0xff]
      %v939 = vld [vmem:[%s920 + $0x90] sm:$0xff]
      %v940 = vld [vmem:[%s920 + $0x98] sm:$0xff]
      %v941 = vld [vmem:[%s920 + $0xa0] sm:$0xff]
      %v942 = vld [vmem:[%s920 + $0xa8] sm:$0xff]
      %v943 = vld [vmem:[%s920 + $0xb0] sm:$0xff]
      %v944 = vld [vmem:[%s920 + $0xb8] sm:$0xff]
      %v945 = vld [vmem:[%s920 + $0xc0] sm:$0xff]
      %v946 = vld [vmem:[%s920 + $0xc8] sm:$0xff]
      %v947 = vld [vmem:[%s920 + $0xd0] sm:$0xff]
      %v948 = vld [vmem:[%s920 + $0xd8] sm:$0xff]
      %v949 = vld [vmem:[%s920 + $0xe0] sm:$0xff]
      %v950 = vld [vmem:[%s920 + $0xe8] sm:$0xff]
      %v951 = vld [vmem:[%s920 + $0xf0] sm:$0xff]
      %v952 = vld [vmem:[%s920 + $0xf8] sm:$0xff]
      %v953 = vld [vmem:[%s920 + $0x100] sm:$0xff]
      %v954 = vld [vmem:[%s920 + $0x108] sm:$0xff]
      %v955 = vld [vmem:[%s920 + $0x110] sm:$0xff]
      %v956 = vld [vmem:[%s920 + $0x118] sm:$0xff]
      %v957 = vld [vmem:[%s920 + $0x120] sm:$0xff]
      %v958 = vld [vmem:[%s920 + $0x128] sm:$0xff]
      %v959 = vld [vmem:[%s920 + $0x130] sm:$0xff]
      %v960 = vld [vmem:[%s920 + $0x138] sm:$0xff]
      %v961 = vld [vmem:[%s920 + $0x140] sm:$0xff]
      %v962 = vld [vmem:[%s920 + $0x148] sm:$0xff]
      %v963 = vld [vmem:[%s920 + $0x150] sm:$0xff]
      %v964 = vld [vmem:[%s920 + $0x158] sm:$0xff]
      %v965 = vld [vmem:[%s920 + $0x160] sm:$0xff]
      %v966 = vld [vmem:[%s920 + $0x168] sm:$0xff]
      %v967 = vld [vmem:[%s920 + $0x170] sm:$0xff]
      %v968 = vld [vmem:[%s920 + $0x178] sm:$0xff]
      %v969 = vld [vmem:[%s920 + $0x180] sm:$0xff]
      %v970 = vld [vmem:[%s920 + $0x188] sm:$0xff]
      %v971 = vld [vmem:[%s920 + $0x190] sm:$0xff]
      %v972 = vld [vmem:[%s920 + $0x198] sm:$0xff]
      %v973 = vld [vmem:[%s920 + $0x1a0] sm:$0xff]
      %v974 = vld [vmem:[%s920 + $0x1a8] sm:$0xff]
      %vm979 = vcmask 1045504
      %v980 = vrot.slane %v916, 2
      %v981 = vrot.slane %v676, 2
      %v982 = vsel %vm979, %v980, %v981
      %v983 = vrot.slane %v917, 2
      %v984 = vrot.slane %v677, 2
      %v985 = vsel %vm979, %v983, %v984
      %v986 = vrot.slane %v918, 2
      %v987 = vsel %vm979, %v981, %v986
      %v988 = vrot.slane %v919, 2
      %v989 = vsel %vm979, %v984, %v988
      %v992 = vsel %vm493, %v985, 0
      %v994 = vsel %vm493, %v989, 0
      %996 = vmatprep.subr.mxu0 %v922
      %997 = vmatpush1.msra.mxu0 %v921
      %998 = vmatprep.subr.mxu0 %v925
      %999 = vmatpush1.msra.mxu0 %v924
      %1000 = vmatprep.subr.mxu0 %v928
      %1001 = vmatpush1.msra.mxu0 %v927
      %1002 = vmatprep.subr.mxu0 %v931
      %1003 = vmatpush1.msra.mxu0 %v930
      %1004 = vmatprep.subr.mxu0 %v934
      %1005 = vmatpush1.msra.mxu0 %v933
      %1006 = vmatprep.subr.mxu0 %v937
      %1007 = vmatpush1.msra.mxu0 %v936
      %1008 = vmatprep.subr.mxu0 %v940
      %1009 = vmatpush1.msra.mxu0 %v939
      %1010 = vmatprep.subr.mxu0 %v943
      %1011 = vmatpush1.msra.mxu0 %v942
      %1012 = vmatprep.subr.mxu0 %v946
      %1013 = vmatpush1.msra.mxu0 %v945
      %1014 = vmatprep.subr.mxu0 %v949
      %1015 = vmatpush1.msra.mxu0 %v948
      %1016 = vmatprep.subr.mxu0 %v952
      %1017 = vmatpush1.msra.mxu0 %v951
      %1018 = vmatprep.subr.mxu0 %v955
      %1019 = vmatpush1.msra.mxu0 %v954
      %1020 = vmatprep.subr.mxu0 %v958
      %1021 = vmatpush1.msra.mxu0 %v957
      %1022 = vmatprep.subr.mxu0 %v961
      %1023 = vmatpush1.msra.mxu0 %v960
      %1024 = vmatprep.subr.mxu0 %v964
      %1025 = vmatpush1.msra.mxu0 %v963
      %1026 = vmatprep.subr.mxu0 %v967
      %1027 = vmatpush1.msra.mxu0 %v966
      %1028 = vmatprep.subr.mxu0 %v970
      %1029 = vmatpush1.msra.mxu0 %v969
      %1030 = vmatprep.subr.mxu0 %v973
      %1031 = vmatpush1.msra.mxu0 %v972
      %1032 = vmatprep.subr.mxu0 0.0
      %1033 = vmatpush1.msra.mxu0 0.0
      %1034 = vmatprep.subr.mxu0 0.0
      %1035 = vmatpush1.msra.mxu0 0.0
      %1036 = vmatprep.subr.mxu0 0.0
      %1037 = vmatpush1.msra.mxu0 0.0
      %1038 = vmatprep.subr.mxu0 0.0
      %1039 = vmatpush1.msra.mxu0 0.0
      %1040 = vmatprep.subr.mxu0 0.0
      %1041 = vmatpush1.msra.mxu0 0.0
      %1042 = vmatprep.subr.mxu0 0.0
      %1043 = vmatpush1.msra.mxu0 0.0
      %1044 = vmatprep.subr.mxu0 0.0
      %1045 = vmatpush1.msra.mxu0 0.0
      %1046 = vmatprep.subr.mxu0 0.0
      %1047 = vmatpush1.msra.mxu0 0.0
      %1048 = vmatprep.subr.mxu0 0.0
      %1049 = vmatpush1.msra.mxu0 0.0
      %1050 = vmatprep.subr.mxu0 0.0
      %1051 = vmatpush1.msra.mxu0 0.0
      %1052 = vmatprep.subr.mxu0 0.0
      %1053 = vmatpush1.msra.mxu0 0.0
      %1054 = vmatprep.subr.mxu0 0.0
      %1055 = vmatpush1.msra.mxu0 0.0
      %1056 = vmatprep.subr.mxu0 0.0
      %1057 = vmatpush1.msra.mxu0 0.0
      %1058 = vmatprep.subr.mxu0 0.0
      %1059 = vmatpush1.msra.mxu0 0.0
      %1060 = vmatprep.mubr.f32.mxu0 %v992
      %1061 = vmatmul.mubr.f32.gmra.mrb[0].mxu0 %v982
      %v1062 = vpop.f32.mrb[0].mxu0
      %v1063 = vadd.f32 0.0, %v1062
      %v1064 = vpop.f32.mrb[0].mxu0
      %v1065 = vadd.f32 0.0, %v1064
      %1066 = vmatprep.mubr.f32.mxu0 %v994
      %1067 = vmatmul.mubr.f32.gmra.mrb[0].mxu0 %v987
      %v1068 = vpop.f32.mrb[0].mxu0
      %v1069 = vadd.f32 0.0, %v1068
      %v1070 = vpop.f32.mrb[0].mxu0
      %v1071 = vadd.f32 0.0, %v1070
      %1072 = vdwg.mxu0
      %1073 = vmatprep.subr.mxu0 0.0
      %1074 = vmatpush1.msra.mxu0 %v923
      %1075 = vmatprep.subr.mxu0 0.0
      %1076 = vmatpush1.msra.mxu0 %v926
      %1077 = vmatprep.subr.mxu0 0.0
      %1078 = vmatpush1.msra.mxu0 %v929
      %1079 = vmatprep.subr.mxu0 0.0
      %1080 = vmatpush1.msra.mxu0 %v932
      %1081 = vmatprep.subr.mxu0 0.0
      %1082 = vmatpush1.msra.mxu0 %v935
      %1083 = vmatprep.subr.mxu0 0.0
      %1084 = vmatpush1.msra.mxu0 %v938
      %1085 = vmatprep.subr.mxu0 0.0
      %1086 = vmatpush1.msra.mxu0 %v941
      %1087 = vmatprep.subr.mxu0 0.0
      %1088 = vmatpush1.msra.mxu0 %v944
      %1089 = vmatprep.subr.mxu0 0.0
      %1090 = vmatpush1.msra.mxu0 %v947
      %1091 = vmatprep.subr.mxu0 0.0
      %1092 = vmatpush1.msra.mxu0 %v950
      %1093 = vmatprep.subr.mxu0 0.0
      %1094 = vmatpush1.msra.mxu0 %v953
      %1095 = vmatprep.subr.mxu0 0.0
      %1096 = vmatpush1.msra.mxu0 %v956
      %1097 = vmatprep.subr.mxu0 0.0
      %1098 = vmatpush1.msra.mxu0 %v959
      %1099 = vmatprep.subr.mxu0 0.0
      %1100 = vmatpush1.msra.mxu0 %v962
      %1101 = vmatprep.subr.mxu0 0.0
      %1102 = vmatpush1.msra.mxu0 %v965
      %1103 = vmatprep.subr.mxu0 0.0
      %1104 = vmatpush1.msra.mxu0 %v968
      %1105 = vmatprep.subr.mxu0 0.0
      %1106 = vmatpush1.msra.mxu0 %v971
      %1107 = vmatprep.subr.mxu0 0.0
      %1108 = vmatpush1.msra.mxu0 %v974
      %1109 = vmatprep.subr.mxu0 0.0
      %1110 = vmatpush1.msra.mxu0 0.0
      %1111 = vmatprep.subr.mxu0 0.0
      %1112 = vmatpush1.msra.mxu0 0.0
      %1113 = vmatprep.subr.mxu0 0.0
      %1114 = vmatpush1.msra.mxu0 0.0
      %1115 = vmatprep.subr.mxu0 0.0
      %1116 = vmatpush1.msra.mxu0 0.0
      %1117 = vmatprep.subr.mxu0 0.0
      %1118 = vmatpush1.msra.mxu0 0.0
      %1119 = vmatprep.subr.mxu0 0.0
      %1120 = vmatpush1.msra.mxu0 0.0
      %1121 = vmatprep.subr.mxu0 0.0
      %1122 = vmatpush1.msra.mxu0 0.0
      %1123 = vmatprep.subr.mxu0 0.0
      %1124 = vmatpush1.msra.mxu0 0.0
      %1125 = vmatprep.subr.mxu0 0.0
      %1126 = vmatpush1.msra.mxu0 0.0
      %1127 = vmatprep.subr.mxu0 0.0
      %1128 = vmatpush1.msra.mxu0 0.0
      %1129 = vmatprep.subr.mxu0 0.0
      %1130 = vmatpush1.msra.mxu0 0.0
      %1131 = vmatprep.subr.mxu0 0.0
      %1132 = vmatpush1.msra.mxu0 0.0
      %1133 = vmatprep.subr.mxu0 0.0
      %1134 = vmatpush1.msra.mxu0 0.0
      %1135 = vmatprep.subr.mxu0 0.0
      %1136 = vmatpush1.msra.mxu0 0.0
      %1137 = vmatprep.mubr.f32.mxu0 %v992
      %1138 = vmatmul.mubr.f32.gmra.mrb[0].mxu0 %v982
      %v1139 = vpop.f32.mrb[0].mxu0
      %v1140 = vadd.f32 0.0, %v1139
      %v1141 = vpop.f32.mrb[0].mxu0
      %1142 = vmatprep.mubr.f32.mxu0 %v994
      %1143 = vmatmul.mubr.f32.gmra.mrb[0].mxu0 %v987
      %v1144 = vpop.f32.mrb[0].mxu0
      %v1145 = vadd.f32 0.0, %v1144
      %v1146 = vpop.f32.mrb[0].mxu0
      %1147 = vdwg.mxu0
      %v1148 = vadd.f32 %v910, %v1063
      %v1149 = vadd.f32 %v911, %v1065
      %v1150 = vadd.f32 %v912, %v1140
      %v1151 = vadd.f32 %v913, %v1069
      %v1152 = vadd.f32 %v914, %v1071
      %v1153 = vadd.f32 %v915, %v1145
      %vm1154 = vcmp.ge.f32.partialorder %v1148, 0.0
      %vm1155 = vcmp.ge.f32.partialorder %v1151, 0.0
      %v1156 = vmul.f32 %v1148, 0.2
      %v1157 = vmul.f32 %v1151, 0.2
      %v1158 = vsel %vm1154, %v1148, %v1156
      %v1159 = vsel %vm1155, %v1151, %v1157
      %1160 = vst.msk [vmem:[#allocation3] ss:$8 sm:$0x3] %vm392, 0.0
      %1161 = vst.msk [vmem:[#allocation3] ss:$8 sm:$0x0] %vm392, 0.0
      %s1162 = scalar_lea.vmem [#allocation3], 33
      %1163 = vst.msk [vmem:[%s1162] ss:$8 sm:$0x3] %vm392, 0.0
      %1164 = vst.msk [vmem:[%s1162] ss:$8 sm:$0x0] %vm392, 0.0
      %1165 = vst.msk [vmem:[#allocation3] sm:$0xff] %vm398, 0.0
      %1166 = vst.msk [vmem:[#allocation3 + $0x10] sm:$0xff] %vm398, 0.0
      %1167 = vst.msk [vmem:[#allocation3 + $0x20] sm:$0x3] %vm401, 0.0
      %1168 = vst.msk [vmem:[#allocation3 + $0x8] sm:$0xff] %vm403, 0.0
      %1169 = vst.msk [vmem:[#allocation3 + $0x18] sm:$0xff] %vm403, 0.0
      %1170 = vst.msk [vmem:[#allocation3 + $0x28] sm:$0x3] %vm406, 0.0
      %v1173 = vrot.slane %v1158, 7
      %v1174 = vrot.slane %v1159, 7
      %v1175 = vsel %vm410, %v1173, %v1174
      %1176 = vrot.lane.b32.xlu0 %v1173, 8
      %v1177 = vpop.permute.xlu0 %1176
      %1178 = vrot.lane.b32.xlu0 %v1175, 8
      %v1179 = vpop.permute.xlu0 %1178
      %1180 = vrot.lane.b32.xlu0 %v1174, 8
      %v1181 = vpop.permute.xlu0 %1180
      %1185 = vst.msk [vmem:[#allocation3] sm:$0xfe] %vm423, %v1177
      %1186 = vst.msk [vmem:[#allocation3 + $0x8] sm:$0xfe] %vm425, %v1177
      %1187 = vst.msk [vmem:[#allocation3 + $0x10] sm:$0xff] %vm427, %v1179
      %1188 = vst.msk [vmem:[#allocation3 + $0x18] sm:$0xff] %vm398, %v1179
      %1189 = vst.msk [vmem:[#allocation3 + $0x20] sm:$0x1] %vm430, %v1181
      %1190 = vst.msk [vmem:[#allocation3 + $0x28] sm:$0x1] %vm432, %v1181
      %v1191 = vld [vmem:[%s6] sm:$0x3]
      %v1192 = vld [vmem:[#allocation3] sm:$0xff]
      %v1193 = vld [vmem:[#allocation3 + $0x8] sm:$0xff]
      %v1194 = vld [vmem:[#allocation3 + $0x10] sm:$0xff]
      %v1195 = vld [vmem:[#allocation3 + $0x18] sm:$0xff]
      %v1196 = vld [vmem:[%s5] sm:$0xff]
      %v1197 = vld [vmem:[%s5 + $0x8] sm:$0xff]
      %v1198 = vld [vmem:[%s5 + $0x10] sm:$0xff]
      %v1199 = vld [vmem:[%s5 + $0x18] sm:$0xff]
      %v1200 = vld [vmem:[%s5 + $0x20] sm:$0xff]
      %v1201 = vld [vmem:[%s5 + $0x28] sm:$0xff]
      %v1202 = vld [vmem:[%s5 + $0x30] sm:$0xff]
      %v1203 = vld [vmem:[%s5 + $0x38] sm:$0xff]
      %v1204 = vld [vmem:[%s5 + $0x40] sm:$0xff]
      %v1205 = vld [vmem:[%s5 + $0x48] sm:$0xff]
      %v1206 = vld [vmem:[%s5 + $0x50] sm:$0xff]
      %v1207 = vld [vmem:[%s5 + $0x58] sm:$0xff]
      %v1208 = vld [vmem:[%s5 + $0x60] sm:$0xff]
      %v1209 = vld [vmem:[%s5 + $0x68] sm:$0xff]
      %v1210 = vld [vmem:[%s5 + $0x70] sm:$0xff]
      %v1211 = vld [vmem:[%s5 + $0x78] sm:$0xff]
      %v1212 = vld [vmem:[%s5 + $0x80] sm:$0xff]
      %v1213 = vld [vmem:[%s5 + $0x88] sm:$0xff]
      %v1214 = vld [vmem:[%s5 + $0x90] sm:$0xff]
      %v1215 = vld [vmem:[%s5 + $0x98] sm:$0xff]
      %v1216 = vld [vmem:[%s5 + $0xa0] sm:$0xff]
      %v1217 = vld [vmem:[%s5 + $0xa8] sm:$0xff]
      %v1218 = vld [vmem:[%s5 + $0xb0] sm:$0xff]
      %v1219 = vld [vmem:[%s5 + $0xb8] sm:$0xff]
      %v1220 = vld [vmem:[%s5 + $0xc0] sm:$0xff]
      %v1221 = vld [vmem:[%s5 + $0xc8] sm:$0xff]
      %v1222 = vld [vmem:[%s5 + $0xd0] sm:$0xff]
      %v1223 = vld [vmem:[%s5 + $0xd8] sm:$0xff]
      %v1224 = vld [vmem:[%s5 + $0xe0] sm:$0xff]
      %v1225 = vld [vmem:[%s5 + $0xe8] sm:$0xff]
      %v1226 = vld [vmem:[%s5 + $0xf0] sm:$0xff]
      %v1227 = vld [vmem:[%s5 + $0xf8] sm:$0xff]
      %v1228 = vld [vmem:[%s5 + $0x100] sm:$0xff]
      %v1229 = vld [vmem:[%s5 + $0x108] sm:$0xff]
      %v1230 = vld [vmem:[%s5 + $0x110] sm:$0xff]
      %v1231 = vld [vmem:[%s5 + $0x118] sm:$0xff]
      %v1233 = vsel %vm493, %v1193, 0
      %v1236 = vsel %vm493, %v1195, 0
      %1238 = vmatprep.subr.mxu0 %v1197
      %1239 = vmatpush1.msra.mxu0 %v1196
      %1240 = vmatprep.subr.mxu0 %v1199
      %1241 = vmatpush1.msra.mxu0 %v1198
      %1242 = vmatprep.subr.mxu0 %v1201
      %1243 = vmatpush1.msra.mxu0 %v1200
      %1244 = vmatprep.subr.mxu0 %v1203
      %1245 = vmatpush1.msra.mxu0 %v1202
      %1246 = vmatprep.subr.mxu0 %v1205
      %1247 = vmatpush1.msra.mxu0 %v1204
      %1248 = vmatprep.subr.mxu0 %v1207
      %1249 = vmatpush1.msra.mxu0 %v1206
      %1250 = vmatprep.subr.mxu0 %v1209
      %1251 = vmatpush1.msra.mxu0 %v1208
      %1252 = vmatprep.subr.mxu0 %v1211
      %1253 = vmatpush1.msra.mxu0 %v1210
      %1254 = vmatprep.subr.mxu0 %v1213
      %1255 = vmatpush1.msra.mxu0 %v1212
      %1256 = vmatprep.subr.mxu0 %v1215
      %1257 = vmatpush1.msra.mxu0 %v1214
      %1258 = vmatprep.subr.mxu0 %v1217
      %1259 = vmatpush1.msra.mxu0 %v1216
      %1260 = vmatprep.subr.mxu0 %v1219
      %1261 = vmatpush1.msra.mxu0 %v1218
      %1262 = vmatprep.subr.mxu0 %v1221
      %1263 = vmatpush1.msra.mxu0 %v1220
      %1264 = vmatprep.subr.mxu0 %v1223
      %1265 = vmatpush1.msra.mxu0 %v1222
      %1266 = vmatprep.subr.mxu0 %v1225
      %1267 = vmatpush1.msra.mxu0 %v1224
      %1268 = vmatprep.subr.mxu0 %v1227
      %1269 = vmatpush1.msra.mxu0 %v1226
      %1270 = vmatprep.subr.mxu0 %v1229
      %1271 = vmatpush1.msra.mxu0 %v1228
      %1272 = vmatprep.subr.mxu0 %v1231
      %1273 = vmatpush1.msra.mxu0 %v1230
      %1274 = vmatprep.subr.mxu0 0.0
      %1275 = vmatpush1.msra.mxu0 0.0
      %1276 = vmatprep.subr.mxu0 0.0
      %1277 = vmatpush1.msra.mxu0 0.0
      %1278 = vmatprep.subr.mxu0 0.0
      %1279 = vmatpush1.msra.mxu0 0.0
      %1280 = vmatprep.subr.mxu0 0.0
      %1281 = vmatpush1.msra.mxu0 0.0
      %1282 = vmatprep.subr.mxu0 0.0
      %1283 = vmatpush1.msra.mxu0 0.0
      %1284 = vmatprep.subr.mxu0 0.0
      %1285 = vmatpush1.msra.mxu0 0.0
      %1286 = vmatprep.subr.mxu0 0.0
      %1287 = vmatpush1.msra.mxu0 0.0
      %1288 = vmatprep.subr.mxu0 0.0
      %1289 = vmatpush1.msra.mxu0 0.0
      %1290 = vmatprep.subr.mxu0 0.0
      %1291 = vmatpush1.msra.mxu0 0.0
      %1292 = vmatprep.subr.mxu0 0.0
      %1293 = vmatpush1.msra.mxu0 0.0
      %1294 = vmatprep.subr.mxu0 0.0
      %1295 = vmatpush1.msra.mxu0 0.0
      %1296 = vmatprep.subr.mxu0 0.0
      %1297 = vmatpush1.msra.mxu0 0.0
      %1298 = vmatprep.subr.mxu0 0.0
      %1299 = vmatpush1.msra.mxu0 0.0
      %1300 = vmatprep.subr.mxu0 0.0
      %1301 = vmatpush1.msra.mxu0 0.0
      %1302 = vmatprep.mubr.f32.mxu0 %v1233
      %1303 = vmatmul.mubr.f32.gmra.mrb[0].mxu0 %v1192
      %v1304 = vpop.f32.mrb[0].mxu0
      %v1305 = vadd.f32 0.0, %v1304
      %v1306 = vpop.f32.mrb[0].mxu0
      %v1307 = vadd.f32 0.0, %v1306
      %1308 = vmatprep.mubr.f32.mxu0 %v1236
      %1309 = vmatmul.mubr.f32.gmra.mrb[0].mxu0 %v1194
      %v1310 = vpop.f32.mrb[0].mxu0
      %v1311 = vadd.f32 0.0, %v1310
      %v1312 = vpop.f32.mrb[0].mxu0
      %v1313 = vadd.f32 0.0, %v1312
      %1314 = vdwg.mxu0
      %v1316 = vlaneseq
      %v1317 = vshrl.u32 %v1316, 7
      %v1318 = vsub.s32 0, %v1317
      %v1319 = vrot.slane %v1191, %v1318
      %v1320 = vlaneseq
      %v1321 = vshrl.u32 %v1320, 7
      %v1322 = vsub.s32 1, %v1321
      %v1323 = vrot.slane %v1191, %v1322
      %v1326 = vadd.f32 %v1319, %v1305
      %v1327 = vadd.f32 %v1323, %v1307
      %v1328 = vadd.f32 %v1319, %v1311
      %v1329 = vadd.f32 %v1323, %v1313
      %v1330 = vld [vmem:[#allocation3] sm:$0xfe]
      %v1331 = vld [vmem:[#allocation3 + $0x8] sm:$0xfe]
      %v1332 = vld [vmem:[#allocation3 + $0x10] sm:$0xff]
      %v1333 = vld [vmem:[#allocation3 + $0x18] sm:$0xff]
      %v1334 = vld [vmem:[#allocation3 + $0x20] sm:$0x1]
      %v1335 = vld [vmem:[#allocation3 + $0x28] sm:$0x1]
      %s1336 = scalar_lea.vmem %s5, 288
      %v1337 = vld [vmem:[%s1336] sm:$0xff]
      %v1338 = vld [vmem:[%s1336 + $0x8] sm:$0xff]
      %v1339 = vld [vmem:[%s1336 + $0x10] sm:$0xff]
      %v1340 = vld [vmem:[%s1336 + $0x18] sm:$0xff]
      %v1341 = vld [vmem:[%s1336 + $0x20] sm:$0xff]
      %v1342 = vld [vmem:[%s1336 + $0x28] sm:$0xff]
      %v1343 = vld [vmem:[%s1336 + $0x30] sm:$0xff]
      %v1344 = vld [vmem:[%s1336 + $0x38] sm:$0xff]
      %v1345 = vld [vmem:[%s1336 + $0x40] sm:$0xff]
      %v1346 = vld [vmem:[%s1336 + $0x48] sm:$0xff]
      %v1347 = vld [vmem:[%s1336 + $0x50] sm:$0xff]
      %v1348 = vld [vmem:[%s1336 + $0x58] sm:$0xff]
      %v1349 = vld [vmem:[%s1336 + $0x60] sm:$0xff]
      %v1350 = vld [vmem:[%s1336 + $0x68] sm:$0xff]
      %v1351 = vld [vmem:[%s1336 + $0x70] sm:$0xff]
      %v1352 = vld [vmem:[%s1336 + $0x78] sm:$0xff]
      %v1353 = vld [vmem:[%s1336 + $0x80] sm:$0xff]
      %v1354 = vld [vmem:[%s1336 + $0x88] sm:$0xff]
      %v1355 = vld [vmem:[%s1336 + $0x90] sm:$0xff]
      %v1356 = vld [vmem:[%s1336 + $0x98] sm:$0xff]
      %v1357 = vld [vmem:[%s1336 + $0xa0] sm:$0xff]
      %v1358 = vld [vmem:[%s1336 + $0xa8] sm:$0xff]
      %v1359 = vld [vmem:[%s1336 + $0xb0] sm:$0xff]
      %v1360 = vld [vmem:[%s1336 + $0xb8] sm:$0xff]
      %v1361 = vld [vmem:[%s1336 + $0xc0] sm:$0xff]
      %v1362 = vld [vmem:[%s1336 + $0xc8] sm:$0xff]
      %v1363 = vld [vmem:[%s1336 + $0xd0] sm:$0xff]
      %v1364 = vld [vmem:[%s1336 + $0xd8] sm:$0xff]
      %v1365 = vld [vmem:[%s1336 + $0xe0] sm:$0xff]
      %v1366 = vld [vmem:[%s1336 + $0xe8] sm:$0xff]
      %v1367 = vld [vmem:[%s1336 + $0xf0] sm:$0xff]
      %v1368 = vld [vmem:[%s1336 + $0xf8] sm:$0xff]
      %v1369 = vld [vmem:[%s1336 + $0x100] sm:$0xff]
      %v1370 = vld [vmem:[%s1336 + $0x108] sm:$0xff]
      %v1371 = vld [vmem:[%s1336 + $0x110] sm:$0xff]
      %v1372 = vld [vmem:[%s1336 + $0x118] sm:$0xff]
      %v1379 = vrot.slane %v1330, 1
      %v1380 = vrot.slane %v1332, 1
      %v1381 = vsel %vm741, %v1379, %v1380
      %v1382 = vrot.slane %v1331, 1
      %v1383 = vrot.slane %v1333, 1
      %v1384 = vsel %vm741, %v1382, %v1383
      %v1385 = vrot.slane %v1334, 1
      %v1386 = vsel %vm741, %v1380, %v1385
      %v1387 = vrot.slane %v1335, 1
      %v1388 = vsel %vm741, %v1383, %v1387
      %v1391 = vsel %vm493, %v1384, 0
      %v1393 = vsel %vm493, %v1388, 0
      %1395 = vmatprep.subr.mxu0 %v1338
      %1396 = vmatpush1.msra.mxu0 %v1337
      %1397 = vmatprep.subr.mxu0 %v1340
      %1398 = vmatpush1.msra.mxu0 %v1339
      %1399 = vmatprep.subr.mxu0 %v1342
      %1400 = vmatpush1.msra.mxu0 %v1341
      %1401 = vmatprep.subr.mxu0 %v1344
      %1402 = vmatpush1.msra.mxu0 %v1343
      %1403 = vmatprep.subr.mxu0 %v1346
      %1404 = vmatpush1.msra.mxu0 %v1345
      %1405 = vmatprep.subr.mxu0 %v1348
      %1406 = vmatpush1.msra.mxu0 %v1347
      %1407 = vmatprep.subr.mxu0 %v1350
      %1408 = vmatpush1.msra.mxu0 %v1349
      %1409 = vmatprep.subr.mxu0 %v1352
      %1410 = vmatpush1.msra.mxu0 %v1351
      %1411 = vmatprep.subr.mxu0 %v1354
      %1412 = vmatpush1.msra.mxu0 %v1353
      %1413 = vmatprep.subr.mxu0 %v1356
      %1414 = vmatpush1.msra.mxu0 %v1355
      %1415 = vmatprep.subr.mxu0 %v1358
      %1416 = vmatpush1.msra.mxu0 %v1357
      %1417 = vmatprep.subr.mxu0 %v1360
      %1418 = vmatpush1.msra.mxu0 %v1359
      %1419 = vmatprep.subr.mxu0 %v1362
      %1420 = vmatpush1.msra.mxu0 %v1361
      %1421 = vmatprep.subr.mxu0 %v1364
      %1422 = vmatpush1.msra.mxu0 %v1363
      %1423 = vmatprep.subr.mxu0 %v1366
      %1424 = vmatpush1.msra.mxu0 %v1365
      %1425 = vmatprep.subr.mxu0 %v1368
      %1426 = vmatpush1.msra.mxu0 %v1367
      %1427 = vmatprep.subr.mxu0 %v1370
      %1428 = vmatpush1.msra.mxu0 %v1369
      %1429 = vmatprep.subr.mxu0 %v1372
      %1430 = vmatpush1.msra.mxu0 %v1371
      %1431 = vmatprep.subr.mxu0 0.0
      %1432 = vmatpush1.msra.mxu0 0.0
      %1433 = vmatprep.subr.mxu0 0.0
      %1434 = vmatpush1.msra.mxu0 0.0
      %1435 = vmatprep.subr.mxu0 0.0
      %1436 = vmatpush1.msra.mxu0 0.0
      %1437 = vmatprep.subr.mxu0 0.0
      %1438 = vmatpush1.msra.mxu0 0.0
      %1439 = vmatprep.subr.mxu0 0.0
      %1440 = vmatpush1.msra.mxu0 0.0
      %1441 = vmatprep.subr.mxu0 0.0
      %1442 = vmatpush1.msra.mxu0 0.0
      %1443 = vmatprep.subr.mxu0 0.0
      %1444 = vmatpush1.msra.mxu0 0.0
      %1445 = vmatprep.subr.mxu0 0.0
      %1446 = vmatpush1.msra.mxu0 0.0
      %1447 = vmatprep.subr.mxu0 0.0
      %1448 = vmatpush1.msra.mxu0 0.0
      %1449 = vmatprep.subr.mxu0 0.0
      %1450 = vmatpush1.msra.mxu0 0.0
      %1451 = vmatprep.subr.mxu0 0.0
      %1452 = vmatpush1.msra.mxu0 0.0
      %1453 = vmatprep.subr.mxu0 0.0
      %1454 = vmatpush1.msra.mxu0 0.0
      %1455 = vmatprep.subr.mxu0 0.0
      %1456 = vmatpush1.msra.mxu0 0.0
      %1457 = vmatprep.subr.mxu0 0.0
      %1458 = vmatpush1.msra.mxu0 0.0
      %1459 = vmatprep.mubr.f32.mxu0 %v1391
      %1460 = vmatmul.mubr.f32.gmra.mrb[0].mxu0 %v1381
      %v1461 = vpop.f32.mrb[0].mxu0
      %v1462 = vadd.f32 0.0, %v1461
      %v1463 = vpop.f32.mrb[0].mxu0
      %v1464 = vadd.f32 0.0, %v1463
      %1465 = vmatprep.mubr.f32.mxu0 %v1393
      %1466 = vmatmul.mubr.f32.gmra.mrb[0].mxu0 %v1386
      %v1467 = vpop.f32.mrb[0].mxu0
      %v1468 = vadd.f32 0.0, %v1467
      %v1469 = vpop.f32.mrb[0].mxu0
      %v1470 = vadd.f32 0.0, %v1469
      %1471 = vdwg.mxu0
      %v1472 = vadd.f32 %v1326, %v1462
      %v1473 = vadd.f32 %v1327, %v1464
      %v1474 = vadd.f32 %v1328, %v1468
      %v1475 = vadd.f32 %v1329, %v1470
      %v1476 = vld [vmem:[#allocation3] sm:$0xfc]
      %v1477 = vld [vmem:[#allocation3 + $0x8] sm:$0xfc]
      %v1478 = vld [vmem:[#allocation3 + $0x20] sm:$0x3]
      %v1479 = vld [vmem:[#allocation3 + $0x28] sm:$0x3]
      %s1480 = scalar_lea.vmem %s5, 576
      %v1481 = vld [vmem:[%s1480] sm:$0xff]
      %v1482 = vld [vmem:[%s1480 + $0x8] sm:$0xff]
      %v1483 = vld [vmem:[%s1480 + $0x10] sm:$0xff]
      %v1484 = vld [vmem:[%s1480 + $0x18] sm:$0xff]
      %v1485 = vld [vmem:[%s1480 + $0x20] sm:$0xff]
      %v1486 = vld [vmem:[%s1480 + $0x28] sm:$0xff]
      %v1487 = vld [vmem:[%s1480 + $0x30] sm:$0xff]
      %v1488 = vld [vmem:[%s1480 + $0x38] sm:$0xff]
      %v1489 = vld [vmem:[%s1480 + $0x40] sm:$0xff]
      %v1490 = vld [vmem:[%s1480 + $0x48] sm:$0xff]
      %v1491 = vld [vmem:[%s1480 + $0x50] sm:$0xff]
      %v1492 = vld [vmem:[%s1480 + $0x58] sm:$0xff]
      %v1493 = vld [vmem:[%s1480 + $0x60] sm:$0xff]
      %v1494 = vld [vmem:[%s1480 + $0x68] sm:$0xff]
      %v1495 = vld [vmem:[%s1480 + $0x70] sm:$0xff]
      %v1496 = vld [vmem:[%s1480 + $0x78] sm:$0xff]
      %v1497 = vld [vmem:[%s1480 + $0x80] sm:$0xff]
      %v1498 = vld [vmem:[%s1480 + $0x88] sm:$0xff]
      %v1499 = vld [vmem:[%s1480 + $0x90] sm:$0xff]
      %v1500 = vld [vmem:[%s1480 + $0x98] sm:$0xff]
      %v1501 = vld [vmem:[%s1480 + $0xa0] sm:$0xff]
      %v1502 = vld [vmem:[%s1480 + $0xa8] sm:$0xff]
      %v1503 = vld [vmem:[%s1480 + $0xb0] sm:$0xff]
      %v1504 = vld [vmem:[%s1480 + $0xb8] sm:$0xff]
      %v1505 = vld [vmem:[%s1480 + $0xc0] sm:$0xff]
      %v1506 = vld [vmem:[%s1480 + $0xc8] sm:$0xff]
      %v1507 = vld [vmem:[%s1480 + $0xd0] sm:$0xff]
      %v1508 = vld [vmem:[%s1480 + $0xd8] sm:$0xff]
      %v1509 = vld [vmem:[%s1480 + $0xe0] sm:$0xff]
      %v1510 = vld [vmem:[%s1480 + $0xe8] sm:$0xff]
      %v1511 = vld [vmem:[%s1480 + $0xf0] sm:$0xff]
      %v1512 = vld [vmem:[%s1480 + $0xf8] sm:$0xff]
      %v1513 = vld [vmem:[%s1480 + $0x100] sm:$0xff]
      %v1514 = vld [vmem:[%s1480 + $0x108] sm:$0xff]
      %v1515 = vld [vmem:[%s1480 + $0x110] sm:$0xff]
      %v1516 = vld [vmem:[%s1480 + $0x118] sm:$0xff]
      %v1521 = vrot.slane %v1476, 2
      %v1522 = vrot.slane %v1332, 2
      %v1523 = vsel %vm979, %v1521, %v1522
      %v1524 = vrot.slane %v1477, 2
      %v1525 = vrot.slane %v1333, 2
      %v1526 = vsel %vm979, %v1524, %v1525
      %v1527 = vrot.slane %v1478, 2
      %v1528 = vsel %vm979, %v1522, %v1527
      %v1529 = vrot.slane %v1479, 2
      %v1530 = vsel %vm979, %v1525, %v1529
      %v1533 = vsel %vm493, %v1526, 0
      %v1535 = vsel %vm493, %v1530, 0
      %1537 = vmatprep.subr.mxu0 %v1482
      %1538 = vmatpush1.msra.mxu0 %v1481
      %1539 = vmatprep.subr.mxu0 %v1484
      %1540 = vmatpush1.msra.mxu0 %v1483
      %1541 = vmatprep.subr.mxu0 %v1486
      %1542 = vmatpush1.msra.mxu0 %v1485
      %1543 = vmatprep.subr.mxu0 %v1488
      %1544 = vmatpush1.msra.mxu0 %v1487
      %1545 = vmatprep.subr.mxu0 %v1490
      %1546 = vmatpush1.msra.mxu0 %v1489
      %1547 = vmatprep.subr.mxu0 %v1492
      %1548 = vmatpush1.msra.mxu0 %v1491
      %1549 = vmatprep.subr.mxu0 %v1494
      %1550 = vmatpush1.msra.mxu0 %v1493
      %1551 = vmatprep.subr.mxu0 %v1496
      %1552 = vmatpush1.msra.mxu0 %v1495
      %1553 = vmatprep.subr.mxu0 %v1498
      %1554 = vmatpush1.msra.mxu0 %v1497
      %1555 = vmatprep.subr.mxu0 %v1500
      %1556 = vmatpush1.msra.mxu0 %v1499
      %1557 = vmatprep.subr.mxu0 %v1502
      %1558 = vmatpush1.msra.mxu0 %v1501
      %1559 = vmatprep.subr.mxu0 %v1504
      %1560 = vmatpush1.msra.mxu0 %v1503
      %1561 = vmatprep.subr.mxu0 %v1506
      %1562 = vmatpush1.msra.mxu0 %v1505
      %1563 = vmatprep.subr.mxu0 %v1508
      %1564 = vmatpush1.msra.mxu0 %v1507
      %1565 = vmatprep.subr.mxu0 %v1510
      %1566 = vmatpush1.msra.mxu0 %v1509
      %1567 = vmatprep.subr.mxu0 %v1512
      %1568 = vmatpush1.msra.mxu0 %v1511
      %1569 = vmatprep.subr.mxu0 %v1514
      %1570 = vmatpush1.msra.mxu0 %v1513
      %1571 = vmatprep.subr.mxu0 %v1516
      %1572 = vmatpush1.msra.mxu0 %v1515
      %1573 = vmatprep.subr.mxu0 0.0
      %1574 = vmatpush1.msra.mxu0 0.0
      %1575 = vmatprep.subr.mxu0 0.0
      %1576 = vmatpush1.msra.mxu0 0.0
      %1577 = vmatprep.subr.mxu0 0.0
      %1578 = vmatpush1.msra.mxu0 0.0
      %1579 = vmatprep.subr.mxu0 0.0
      %1580 = vmatpush1.msra.mxu0 0.0
      %1581 = vmatprep.subr.mxu0 0.0
      %1582 = vmatpush1.msra.mxu0 0.0
      %1583 = vmatprep.subr.mxu0 0.0
      %1584 = vmatpush1.msra.mxu0 0.0
      %1585 = vmatprep.subr.mxu0 0.0
      %1586 = vmatpush1.msra.mxu0 0.0
      %1587 = vmatprep.subr.mxu0 0.0
      %1588 = vmatpush1.msra.mxu0 0.0
      %1589 = vmatprep.subr.mxu0 0.0
      %1590 = vmatpush1.msra.mxu0 0.0
      %1591 = vmatprep.subr.mxu0 0.0
      %1592 = vmatpush1.msra.mxu0 0.0
      %1593 = vmatprep.subr.mxu0 0.0
      %1594 = vmatpush1.msra.mxu0 0.0
      %1595 = vmatprep.subr.mxu0 0.0
      %1596 = vmatpush1.msra.mxu0 0.0
      %1597 = vmatprep.subr.mxu0 0.0
      %1598 = vmatpush1.msra.mxu0 0.0
      %1599 = vmatprep.subr.mxu0 0.0
      %1600 = vmatpush1.msra.mxu0 0.0
      %1601 = vmatprep.mubr.f32.mxu0 %v1533
      %1602 = vmatmul.mubr.f32.gmra.mrb[0].mxu0 %v1523
      %v1603 = vpop.f32.mrb[0].mxu0
      %v1604 = vadd.f32 0.0, %v1603
      %v1605 = vpop.f32.mrb[0].mxu0
      %v1606 = vadd.f32 0.0, %v1605
      %1607 = vmatprep.mubr.f32.mxu0 %v1535
      %1608 = vmatmul.mubr.f32.gmra.mrb[0].mxu0 %v1528
      %v1609 = vpop.f32.mrb[0].mxu0
      %v1610 = vadd.f32 0.0, %v1609
      %v1611 = vpop.f32.mrb[0].mxu0
      %v1612 = vadd.f32 0.0, %v1611
      %1613 = vdwg.mxu0
      %v1614 = vadd.f32 %v1472, %v1604
      %v1615 = vadd.f32 %v1473, %v1606
      %v1616 = vadd.f32 %v1474, %v1610
      %v1617 = vadd.f32 %v1475, %v1612
      %vm1618 = vcmp.ge.f32.partialorder %v1614, 0.0
      %vm1619 = vcmp.ge.f32.partialorder %v1615, 0.0
      %vm1620 = vcmp.ge.f32.partialorder %v1616, 0.0
      %vm1621 = vcmp.ge.f32.partialorder %v1617, 0.0
      %v1622 = vmul.f32 %v1614, 0.2
      %v1623 = vmul.f32 %v1615, 0.2
      %v1624 = vmul.f32 %v1616, 0.2
      %v1625 = vmul.f32 %v1617, 0.2
      %v1626 = vsel %vm1618, %v1614, %v1622
      %v1627 = vsel %vm1619, %v1615, %v1623
      %v1628 = vsel %vm1620, %v1616, %v1624
      %v1629 = vsel %vm1621, %v1617, %v1625
      %v1630 = vadd.f32 %v1626, %v1149
      %v1631 = vadd.f32 %v1627, %v1150
      %v1632 = vadd.f32 %v1628, %v1152
      %v1633 = vadd.f32 %v1629, %v1153
      %1634 = vst [vmem:[%s282] sm:$0xff] %v1630
      %1635 = vst [vmem:[%s282 + $0x8] sm:$0xff] %v1631
      %1636 = vst [vmem:[%s282 + $0x10] sm:$0xff] %v1632
      %1637 = vst [vmem:[%s282 + $0x18] sm:$0xff] %v1633
      %s1638 = smul.u32 2, %s18
      %p1639 = scmp.lt.s32.totalorder %s1638, 3
      %s1640 = scalar_select %p1639, %s1638, 3
      %s1641 = smul.addr %s1640, 2
      %s1642 = smul.addr %s1641, 8
      %s1643 = scalar_lea.vmem %s7, %s1642
      // Predicated region
      $region49: #{dblock_forward.1} parent=47 // pred_check
        %p1644 = pneg %p188
      $region50: #{dblock_forward.1} parent=47 // pred_check_branch
        %1646 = sbr.rel (%p1644) target = $region52
      $region51: #{dblock_forward.1} parent=47 // pred_region
        %s1647 = smul.u32 2, %s18
      $region52: #{dblock_forward.1} parent=47 // pred_fallthru
        _
    $region48: #{dblock_forward.1} parent=5 // pred_fallthru
      _
    %p1648 = scmp.le.s32.totalorder 2, %s13
    // Predicated region
    $region53: #{dblock_forward.1} parent=5 // pred_check
      %p1649 = pneg %p1648
    $region54: #{dblock_forward.1} parent=5 // pred_check_branch
      %1651 = sbr.rel (%p1649) target = $region56
    $region55: #{dblock_forward.1} parent=5 // pred_region
      %s1652 = ssub.s32 %s13, 2
      // Predicated region
      $region57: #{dblock_forward.1} parent=55 // pred_check
        %p1653 = pneg %p194
      $region58: #{dblock_forward.1} parent=55 // pred_check_branch
        %1655 = sbr.rel (%p1653) target = $region60
      $region59: #{dblock_forward.1} parent=55 // pred_region
        %s1656 = smul.u32 2, %s19
        %p1657 = scmp.lt.s32.totalorder %s1656, 3
        %s1658 = scalar_select %p1657, %s1656, 3
        %s1659 = smul.addr %s1658, 2
        %s1660 = smul.addr %s1659, 8
        %s1661 = scalar_lea.vmem %s7, %s1660
      $region60: #{dblock_forward.1} parent=55 // pred_fallthru
        _
    $region56: #{dblock_forward.1} parent=5 // pred_fallthru
      _
  $region6: #{dblock_forward.1} parent=0 // loop_footer
    %s17 = sadd.s32 1, %s13
  $region7: #{dblock_forward.1} parent=0 // loop_footer_branch
    %12 = sbr.rel target = $region3
  $region8: #{dblock_forward.1} parent=0 // loop_exit
    _

</llo_original>
